<compile_context>
chip_gen: v5e
topology: v5e:2x2
jax: 0.10.0
libtpu: 0.0.40
codegen_flags: <defaults>
</compile_context>

<pallas_src>
import jax
import jax.numpy as jnp
from jax import lax
from jax.experimental import pallas as pl
from jax.experimental.pallas import tpu as pltpu


def _dwconv_kernel(w_ref, b_ref, x_ref, o_ref, xp_ref):
    # w_ref : VMEM (9, C_blk)         3x3 taps with BN scale folded in (f32)
    # b_ref : VMEM (1, C_blk)         folded BN bias (f32)
    # x_ref : VMEM (1, H, W, C_blk)   input tile, NHWC
    # o_ref : VMEM (1, H, W, C_blk)   output tile, NHWC
    # xp_ref: VMEM (H+2, W+2, C_blk)  f32 scratch holding the zero-halo copy
    _, H, W, Cb = o_ref.shape
    Hp, Wp = H + 2, W + 2

    # Build the zero halo in VMEM (replaces the standalone jnp.pad HBM pass):
    # zero only the border rows/cols, then copy the interior.
    zrow = jnp.zeros((1, Wp, Cb), jnp.float32)
    xp_ref[0:1, :, :] = zrow
    xp_ref[Hp - 1:Hp, :, :] = zrow
    zcol = jnp.zeros((Hp, 1, Cb), jnp.float32)
    xp_ref[:, 0:1, :] = zcol
    xp_ref[:, Wp - 1:Wp, :] = zcol
    xp_ref[1:H + 1, 1:W + 1, :] = x_ref[0].astype(jnp.float32)

    # 3x3 depthwise conv, padding=1, stride=1: sum of 9 shifted windows scaled by
    # per-channel taps.  Start the accumulator from the folded BN bias.
    acc = jnp.broadcast_to(b_ref[0, :].astype(jnp.float32), (H, W, Cb))
    for kh in range(3):
        for kw in range(3):
            wk = w_ref[kh * 3 + kw, :].reshape(1, 1, Cb)
            acc = acc + wk * xp_ref[kh:kh + H, kw:kw + W, :]

    o_ref[0] = jnp.maximum(acc, 0.0).astype(o_ref.dtype)   # fused ReLU


def _pick_cblk(c_out, hp, wp, budget_bytes=8 * 1024 * 1024):
    """Largest channel block that divides C_out, is lane-legal, and fits budget."""
    if c_out % 128 != 0:
        # Lane dim must be a multiple of 128 or the full channel extent.
        return c_out
    best = 128
    c = 128
    while c <= c_out:
        if c_out % c == 0 and hp * wp * c * 4 <= budget_bytes:
            best = c
        c += 128
    return best


def dwconv_bn_relu(x, weight, gamma, beta, running_mean, running_var,
                   *, eps=1e-5, stride=1):
    """x: (N, C_in, H, W) NCHW, weight: (C_out, 1, 3, 3) with groups=C_in."""
    # TODO(synk): stride > 1 not implemented (module default stride=1).
    assert stride == 1, "only stride=1 supported"
    N, C_in, H, W = x.shape
    C_out = weight.shape[0]
    assert C_out % C_in == 0
    mult = C_out // C_in   # output channels per group

    # Fold BatchNorm (eval-mode affine) into the conv taps + a per-channel bias.
    scale = (gamma / jnp.sqrt(running_var + eps)).astype(jnp.float32)      # (C_out,)
    bias = (beta - running_mean * scale).astype(jnp.float32).reshape(1, C_out)
    w_scaled = (weight.reshape(C_out, 9).astype(jnp.float32)
                * scale[:, None]).T                                        # (9, C_out)

    # NHWC: channels on the lane axis -> lane-dense loads/stores for realistic C.
    x_nhwc = jnp.transpose(x, (0, 2, 3, 1))                                # (N, H, W, C_in)
    if mult > 1:
        # Expand groups so input channel for output c is simply channel c.
        x_nhwc = jnp.repeat(x_nhwc, mult, axis=3)                          # (N, H, W, C_out)

    Hp, Wp = H + 2, W + 2
    C_blk = _pick_cblk(C_out, Hp, Wp)
    grid = (N, C_out // C_blk)

    # VMEM budget: double-buffered in/out blocks + halo scratch + margin.
    blk_bytes = H * W * C_blk * x.dtype.itemsize
    scratch_bytes = Hp * Wp * C_blk * 4
    vmem_limit = int(min(100 * 1024 * 1024,
                         max(32 * 1024 * 1024,
                             4 * blk_bytes + 2 * scratch_bytes + (1 << 20))))

    # TODO(synk): spatial (H) tiling with an explicit halo for very large images.
    out_nhwc = pl.pallas_call(
        _dwconv_kernel,
        out_shape=jax.ShapeDtypeStruct((N, H, W, C_out), x.dtype),
        grid_spec=pltpu.PrefetchScalarGridSpec(
            num_scalar_prefetch=0,
            grid=grid,
            in_specs=[
                pl.BlockSpec((9, C_blk), lambda n, c: (0, c)),            # taps (VMEM)
                pl.BlockSpec((1, C_blk), lambda n, c: (0, c)),            # bias (VMEM)
                pl.BlockSpec((1, H, W, C_blk), lambda n, c: (n, 0, 0, c)),  # input slab
            ],
            out_specs=pl.BlockSpec((1, H, W, C_blk), lambda n, c: (n, 0, 0, c)),
            scratch_shapes=[pltpu.VMEM((Hp, Wp, C_blk), jnp.float32)],
        ),
        compiler_params=pltpu.CompilerParams(
            dimension_semantics=("parallel", "parallel"),
            vmem_limit_bytes=vmem_limit),
    )(w_scaled, bias, x_nhwc)

    return jnp.transpose(out_nhwc, (0, 3, 1, 2))                           # back to NCHW


def _reference(x, weight, gamma, beta, running_mean, running_var, eps=1e-5):
    C_in = x.shape[1]
    y = lax.conv_general_dilated(
        x.astype(jnp.float32), weight.astype(jnp.float32),
        window_strides=(1, 1), padding=((1, 1), (1, 1)),
        dimension_numbers=("NCHW", "OIHW", "NCHW"),
        feature_group_count=C_in)
    scale = gamma / jnp.sqrt(running_var + eps)
    bias = beta - running_mean * scale
    y = y * scale[None, :, None, None] + bias[None, :, None, None]
    return jnp.maximum(y, 0.0)


if __name__ == "__main__":
    key = jax.random.PRNGKey(0)
    N, C, H, W = 2, 4, 16, 16          # dw_channels = out_channels = 4
    kx, kw, kg, kb, km, kv = jax.random.split(key, 6)

    x = jax.random.normal(kx, (N, C, H, W), dtype=jnp.float32)
    weight = jax.random.normal(kw, (C, 1, 3, 3), dtype=jnp.float32) * 0.2
    gamma = 1.0 + 0.1 * jax.random.normal(kg, (C,), dtype=jnp.float32)
    beta = 0.1 * jax.random.normal(kb, (C,), dtype=jnp.float32)
    running_mean = 0.1 * jax.random.normal(km, (C,), dtype=jnp.float32)
    running_var = 1.0 + 0.1 * jnp.abs(jax.random.normal(kv, (C,), dtype=jnp.float32))

    out = dwconv_bn_relu(x, weight, gamma, beta, running_mean, running_var)
    out = jax.block_until_ready(out)

    ref = _reference(x, weight, gamma, beta, running_mean, running_var)
    assert out.shape == (N, C, H, W)
    assert jnp.allclose(out, ref, atol=1e-4, rtol=1e-4), "mismatch vs reference"
    print("KERNEL_OK")
</pallas_src>

<mosaic_0001>
module attributes {stable_mosaic.version = 11 : i64} {
  func.func @_dwconv_kernel(%arg0: i32, %arg1: i32, %arg2: memref<9x4xf32, #tpu.memory_space<vmem>>, %arg3: memref<1x4xf32, #tpu.memory_space<vmem>>, %arg4: memref<1x16x16x4xf32, #tpu.memory_space<vmem>>, %arg5: memref<1x16x16x4xf32, #tpu.memory_space<vmem>>, %arg6: memref<18x18x4xf32, #tpu.memory_space<vmem>>) attributes {dimension_semantics = [#tpu.dimension_semantics<parallel>, #tpu.dimension_semantics<parallel>], iteration_bounds = array<i64: 2, 1>, scalar_prefetch = 0 : i64, scratch_operands = 1 : i64, tpu.core_type = #tpu.core_type<tc>, window_params = [{transform_indices = @transform_0, window_bounds = array<i64: 9, 4>}, {transform_indices = @transform_1, window_bounds = array<i64: 1, 4>}, {transform_indices = @transform_2, window_bounds = array<i64: 1, 16, 16, 4>}, {transform_indices = @transform_3, window_bounds = array<i64: 1, 16, 16, 4>}]} {
    %cst = arith.constant 0.000000e+00 : f32
    %0 = vector.broadcast %cst : f32 to vector<1x18x4xf32>
    %c0 = arith.constant 0 : index
    %c0_0 = arith.constant 0 : index
    %c0_1 = arith.constant 0 : index
    %1 = vector.load %arg6[%c0, %c0_0, %c0_1] : memref<18x18x4xf32, #tpu.memory_space<vmem>>, vector<1x18x4xf32>
    tpu.vector_store %arg6[%c0, %c0_0, %c0_1], %0 {strides = array<i32>} : memref<18x18x4xf32, #tpu.memory_space<vmem>>, vector<1x18x4xf32>,
    %c17 = arith.constant 17 : index
    %c0_2 = arith.constant 0 : index
    %c0_3 = arith.constant 0 : index
    %2 = vector.load %arg6[%c17, %c0_2, %c0_3] : memref<18x18x4xf32, #tpu.memory_space<vmem>>, vector<1x18x4xf32>
    tpu.vector_store %arg6[%c17, %c0_2, %c0_3], %0 {strides = array<i32>} : memref<18x18x4xf32, #tpu.memory_space<vmem>>, vector<1x18x4xf32>,
    %cst_4 = arith.constant 0.000000e+00 : f32
    %3 = vector.broadcast %cst_4 : f32 to vector<18x1x4xf32>
    %c0_5 = arith.constant 0 : index
    %c0_6 = arith.constant 0 : index
    %c0_7 = arith.constant 0 : index
    %4 = vector.load %arg6[%c0_5, %c0_6, %c0_7] : memref<18x18x4xf32, #tpu.memory_space<vmem>>, vector<18x1x4xf32>
    tpu.vector_store %arg6[%c0_5, %c0_6, %c0_7], %3 {strides = array<i32>} : memref<18x18x4xf32, #tpu.memory_space<vmem>>, vector<18x1x4xf32>,
    %c0_8 = arith.constant 0 : index
    %c17_9 = arith.constant 17 : index
    %c0_10 = arith.constant 0 : index
    %5 = vector.load %arg6[%c0_8, %c17_9, %c0_10] : memref<18x18x4xf32, #tpu.memory_space<vmem>>, vector<18x1x4xf32>
    tpu.vector_store %arg6[%c0_8, %c17_9, %c0_10], %3 {strides = array<i32>} : memref<18x18x4xf32, #tpu.memory_space<vmem>>, vector<18x1x4xf32>,
    %c0_11 = arith.constant 0 : index
    %c0_12 = arith.constant 0 : index
    %c0_13 = arith.constant 0 : index
    %c0_14 = arith.constant 0 : index
    %6 = vector.load %arg4[%c0_11, %c0_12, %c0_13, %c0_14] : memref<1x16x16x4xf32, #tpu.memory_space<vmem>>, vector<1x16x16x4xf32>
    %7 = vector.shape_cast %6 : vector<1x16x16x4xf32> to vector<16x16x4xf32>
    %c1 = arith.constant 1 : index
    %c1_15 = arith.constant 1 : index
    %c0_16 = arith.constant 0 : index
    %8 = vector.load %arg6[%c1, %c1_15, %c0_16] : memref<18x18x4xf32, #tpu.memory_space<vmem>>, vector<16x16x4xf32>
    tpu.vector_store %arg6[%c1, %c1_15, %c0_16], %7 {strides = array<i32>} : memref<18x18x4xf32, #tpu.memory_space<vmem>>, vector<16x16x4xf32>,
    %c0_17 = arith.constant 0 : index
    %c0_18 = arith.constant 0 : index
    %9 = vector.load %arg3[%c0_17, %c0_18] : memref<1x4xf32, #tpu.memory_space<vmem>>, vector<1x4xf32>
    %10 = vector.shape_cast %9 : vector<1x4xf32> to vector<4xf32>
    %11 = vector.shape_cast %10 : vector<4xf32> to vector<1x1x4xf32>
    %12 = vector.broadcast %11 : vector<1x1x4xf32> to vector<16x16x4xf32>
    %c0_19 = arith.constant 0 : index
    %c0_20 = arith.constant 0 : index
    %13 = vector.load %arg2[%c0_19, %c0_20] : memref<9x4xf32, #tpu.memory_space<vmem>>, vector<1x4xf32>
    %14 = vector.shape_cast %13 : vector<1x4xf32> to vector<4xf32>
    %15 = vector.shape_cast %14 : vector<4xf32> to vector<1x1x4xf32>
    %c0_21 = arith.constant 0 : index
    %c0_22 = arith.constant 0 : index
    %c0_23 = arith.constant 0 : index
    %16 = vector.load %arg6[%c0_21, %c0_22, %c0_23] : memref<18x18x4xf32, #tpu.memory_space<vmem>>, vector<16x16x4xf32>
    %17 = vector.broadcast %15 : vector<1x1x4xf32> to vector<16x16x4xf32>
    %18 = arith.mulf %17, %16 : vector<16x16x4xf32>
    %19 = arith.addf %12, %18 : vector<16x16x4xf32>
    %c1_24 = arith.constant 1 : index
    %c0_25 = arith.constant 0 : index
    %20 = vector.load %arg2[%c1_24, %c0_25] : memref<9x4xf32, #tpu.memory_space<vmem>>, vector<1x4xf32>
    %21 = vector.shape_cast %20 : vector<1x4xf32> to vector<4xf32>
    %22 = vector.shape_cast %21 : vector<4xf32> to vector<1x1x4xf32>
    %c0_26 = arith.constant 0 : index
    %c1_27 = arith.constant 1 : index
    %c0_28 = arith.constant 0 : index
    %23 = vector.load %arg6[%c0_26, %c1_27, %c0_28] : memref<18x18x4xf32, #tpu.memory_space<vmem>>, vector<16x16x4xf32>
    %24 = vector.broadcast %22 : vector<1x1x4xf32> to vector<16x16x4xf32>
    %25 = arith.mulf %24, %23 : vector<16x16x4xf32>
    %26 = arith.addf %19, %25 : vector<16x16x4xf32>
    %c2 = arith.constant 2 : index
    %c0_29 = arith.constant 0 : index
    %27 = vector.load %arg2[%c2, %c0_29] : memref<9x4xf32, #tpu.memory_space<vmem>>, vector<1x4xf32>
    %28 = vector.shape_cast %27 : vector<1x4xf32> to vector<4xf32>
    %29 = vector.shape_cast %28 : vector<4xf32> to vector<1x1x4xf32>
    %c0_30 = arith.constant 0 : index
    %c2_31 = arith.constant 2 : index
    %c0_32 = arith.constant 0 : index
    %30 = vector.load %arg6[%c0_30, %c2_31, %c0_32] : memref<18x18x4xf32, #tpu.memory_space<vmem>>, vector<16x16x4xf32>
    %31 = vector.broadcast %29 : vector<1x1x4xf32> to vector<16x16x4xf32>
    %32 = arith.mulf %31, %30 : vector<16x16x4xf32>
    %33 = arith.addf %26, %32 : vector<16x16x4xf32>
    %c3 = arith.constant 3 : index
    %c0_33 = arith.constant 0 : index
    %34 = vector.load %arg2[%c3, %c0_33] : memref<9x4xf32, #tpu.memory_space<vmem>>, vector<1x4xf32>
    %35 = vector.shape_cast %34 : vector<1x4xf32> to vector<4xf32>
    %36 = vector.shape_cast %35 : vector<4xf32> to vector<1x1x4xf32>
    %c1_34 = arith.constant 1 : index
    %c0_35 = arith.constant 0 : index
    %c0_36 = arith.constant 0 : index
    %37 = vector.load %arg6[%c1_34, %c0_35, %c0_36] : memref<18x18x4xf32, #tpu.memory_space<vmem>>, vector<16x16x4xf32>
    %38 = vector.broadcast %36 : vector<1x1x4xf32> to vector<16x16x4xf32>
    %39 = arith.mulf %38, %37 : vector<16x16x4xf32>
    %40 = arith.addf %33, %39 : vector<16x16x4xf32>
    %c4 = arith.constant 4 : index
    %c0_37 = arith.constant 0 : index
    %41 = vector.load %arg2[%c4, %c0_37] : memref<9x4xf32, #tpu.memory_space<vmem>>, vector<1x4xf32>
    %42 = vector.shape_cast %41 : vector<1x4xf32> to vector<4xf32>
    %43 = vector.shape_cast %42 : vector<4xf32> to vector<1x1x4xf32>
    %c1_38 = arith.constant 1 : index
    %c1_39 = arith.constant 1 : index
    %c0_40 = arith.constant 0 : index
    %44 = vector.load %arg6[%c1_38, %c1_39, %c0_40] : memref<18x18x4xf32, #tpu.memory_space<vmem>>, vector<16x16x4xf32>
    %45 = vector.broadcast %43 : vector<1x1x4xf32> to vector<16x16x4xf32>
    %46 = arith.mulf %45, %44 : vector<16x16x4xf32>
    %47 = arith.addf %40, %46 : vector<16x16x4xf32>
    %c5 = arith.constant 5 : index
    %c0_41 = arith.constant 0 : index
    %48 = vector.load %arg2[%c5, %c0_41] : memref<9x4xf32, #tpu.memory_space<vmem>>, vector<1x4xf32>
    %49 = vector.shape_cast %48 : vector<1x4xf32> to vector<4xf32>
    %50 = vector.shape_cast %49 : vector<4xf32> to vector<1x1x4xf32>
    %c1_42 = arith.constant 1 : index
    %c2_43 = arith.constant 2 : index
    %c0_44 = arith.constant 0 : index
    %51 = vector.load %arg6[%c1_42, %c2_43, %c0_44] : memref<18x18x4xf32, #tpu.memory_space<vmem>>, vector<16x16x4xf32>
    %52 = vector.broadcast %50 : vector<1x1x4xf32> to vector<16x16x4xf32>
    %53 = arith.mulf %52, %51 : vector<16x16x4xf32>
    %54 = arith.addf %47, %53 : vector<16x16x4xf32>
    %c6 = arith.constant 6 : index
    %c0_45 = arith.constant 0 : index
    %55 = vector.load %arg2[%c6, %c0_45] : memref<9x4xf32, #tpu.memory_space<vmem>>, vector<1x4xf32>
    %56 = vector.shape_cast %55 : vector<1x4xf32> to vector<4xf32>
    %57 = vector.shape_cast %56 : vector<4xf32> to vector<1x1x4xf32>
    %c2_46 = arith.constant 2 : index
    %c0_47 = arith.constant 0 : index
    %c0_48 = arith.constant 0 : index
    %58 = vector.load %arg6[%c2_46, %c0_47, %c0_48] : memref<18x18x4xf32, #tpu.memory_space<vmem>>, vector<16x16x4xf32>
    %59 = vector.broadcast %57 : vector<1x1x4xf32> to vector<16x16x4xf32>
    %60 = arith.mulf %59, %58 : vector<16x16x4xf32>
    %61 = arith.addf %54, %60 : vector<16x16x4xf32>
    %c7 = arith.constant 7 : index
    %c0_49 = arith.constant 0 : index
    %62 = vector.load %arg2[%c7, %c0_49] : memref<9x4xf32, #tpu.memory_space<vmem>>, vector<1x4xf32>
    %63 = vector.shape_cast %62 : vector<1x4xf32> to vector<4xf32>
    %64 = vector.shape_cast %63 : vector<4xf32> to vector<1x1x4xf32>
    %c2_50 = arith.constant 2 : index
    %c1_51 = arith.constant 1 : index
    %c0_52 = arith.constant 0 : index
    %65 = vector.load %arg6[%c2_50, %c1_51, %c0_52] : memref<18x18x4xf32, #tpu.memory_space<vmem>>, vector<16x16x4xf32>
    %66 = vector.broadcast %64 : vector<1x1x4xf32> to vector<16x16x4xf32>
    %67 = arith.mulf %66, %65 : vector<16x16x4xf32>
    %68 = arith.addf %61, %67 : vector<16x16x4xf32>
    %c8 = arith.constant 8 : index
    %c0_53 = arith.constant 0 : index
    %69 = vector.load %arg2[%c8, %c0_53] : memref<9x4xf32, #tpu.memory_space<vmem>>, vector<1x4xf32>
    %70 = vector.shape_cast %69 : vector<1x4xf32> to vector<4xf32>
    %71 = vector.shape_cast %70 : vector<4xf32> to vector<1x1x4xf32>
    %c2_54 = arith.constant 2 : index
    %c2_55 = arith.constant 2 : index
    %c0_56 = arith.constant 0 : index
    %72 = vector.load %arg6[%c2_54, %c2_55, %c0_56] : memref<18x18x4xf32, #tpu.memory_space<vmem>>, vector<16x16x4xf32>
    %73 = vector.broadcast %71 : vector<1x1x4xf32> to vector<16x16x4xf32>
    %74 = arith.mulf %73, %72 : vector<16x16x4xf32>
    %75 = arith.addf %68, %74 : vector<16x16x4xf32>
    %cst_57 = arith.constant 0.000000e+00 : f32
    %76 = vector.broadcast %cst_57 : f32 to vector<16x16x4xf32>
    %77 = arith.maximumf %75, %76 : vector<16x16x4xf32>
    %c0_58 = arith.constant 0 : index
    %c0_59 = arith.constant 0 : index
    %c0_60 = arith.constant 0 : index
    %c0_61 = arith.constant 0 : index
    %78 = vector.load %arg5[%c0_58, %c0_59, %c0_60, %c0_61] : memref<1x16x16x4xf32, #tpu.memory_space<vmem>>, vector<1x16x16x4xf32>
    %79 = vector.shape_cast %78 : vector<1x16x16x4xf32> to vector<16x16x4xf32>
    %80 = vector.shape_cast %77 : vector<16x16x4xf32> to vector<1x16x16x4xf32>
    tpu.vector_store %arg5[%c0_58, %c0_59, %c0_60, %c0_61], %80 {strides = array<i32>} : memref<1x16x16x4xf32, #tpu.memory_space<vmem>>, vector<1x16x16x4xf32>,
    return
  }
  func.func @transform_0(%arg0: i32, %arg1: i32) -> (i32, i32) {
    %c0_i32 = arith.constant 0 : i32
    %c0_i32_0 = arith.constant 0 : i32
    return %c0_i32, %arg1 : i32, i32
  }
  func.func @transform_1(%arg0: i32, %arg1: i32) -> (i32, i32) {
    %c0_i32 = arith.constant 0 : i32
    %c0_i32_0 = arith.constant 0 : i32
    return %c0_i32, %arg1 : i32, i32
  }
  func.func @transform_2(%arg0: i32, %arg1: i32) -> (i32, i32, i32, i32) {
    %c0_i32 = arith.constant 0 : i32
    %c0_i32_0 = arith.constant 0 : i32
    %c0_i32_1 = arith.constant 0 : i32
    return %arg0, %c0_i32, %c0_i32_0, %arg1 : i32, i32, i32, i32
  }
  func.func @transform_3(%arg0: i32, %arg1: i32) -> (i32, i32, i32, i32) {
    %c0_i32 = arith.constant 0 : i32
    %c0_i32_0 = arith.constant 0 : i32
    %c0_i32_1 = arith.constant 0 : i32
    return %arg0, %c0_i32, %c0_i32_0, %arg1 : i32, i32, i32, i32
  }
}

</mosaic_0001>

<llo_original>
// kernel: tpu_custom_call.1
$region0: #{tpu_custom_call.1}
  #allocation0 [shape = 'u32[]', space=smem, size = 0x4, offset = 0x4, fixed_abs, tag = 'smem constant byte address 0x4 - core index']
  #allocation1 [shape = 'u32[72,128]{1,0:T(1,128)}', space=vmem, size = 0x9000, scoped, tag = 'internal scratch']
  #allocation2 [shape = 'f32[18,18,4]{2,1,0:T(8,128)}', space=vmem, size = 0x36000, scoped, tag = 'scratch operand']
  %s0 = inlined_call_operand.vmem [shape: f32[9,4], index: 0, kind: input, shape index: {}]
  %s1 = inlined_call_operand.vmem [shape: f32[1,4], index: 1, kind: input, shape index: {}]
  %s2 = inlined_call_operand.vmem [shape: f32[2,16,16,4], index: 2, kind: input, shape index: {}]
  %s3 = inlined_call_operand.vmem [shape: f32[2,16,16,4], index: 3, kind: output, shape index: {}]
  %s4 = sld [smem:[#allocation0]]
  $region45: #{tpu_custom_call.1} parent=0
    _
  %s6 = ssub.s32 1, %s4
  %s7 = scalar_select 0, %s6, %s4
  loop: start=0, step=1, limit=4
  $region2: #{tpu_custom_call.1} parent=0 // loop_pre_header
    _
  $region3: #{tpu_custom_call.1} parent=0 // loop_header
    %s9 = sphi 0, %s13
    %p10 = scmp.ge.s32.totalorder %s9, 4
    %s16 = sphi 0, %s28
    %s17 = sphi 0, %s24
    %s18 = sphi 0, %s16
    %s19 = sphi 0, %s17
    %s20 = sphi 0, %s18
    %s21 = sphi 0, %s19
    %s31 = sphi 0, %s33
    %s34 = sphi 0, %s31
    %s35 = sphi 0, %s34
    %s51 = sphi 0, %s35
    %s57 = sphi 0, %s59
    %s60 = sphi 0, %s57
    %s61 = sphi 0, %s60
    %s77 = sphi 0, %s61
    %s85 = sphi 0, %s87
    %s88 = sphi 0, %s85
    %s89 = sphi 0, %s88
    %s105 = sphi 0, %s89
    %s113 = sphi 0, %s115
    %s116 = sphi 0, %s113
    %s117 = sphi 0, %s116
    %s133 = sphi 0, %s117
  $region4: #{tpu_custom_call.1} parent=0 // loop_header_branch
    %12 = sbr.rel (%p10) target = $region8
  $region5: #{tpu_custom_call.1} parent=0 // loop_body
    %s14 = ssub.s32 %s9, 1
    %s15 = ssub.s32 %s9, 2
    %s22 = sadd.s32 1, %s17
    %p23 = scmp.ge.s32.totalorder %s22, 1
    %s24 = scalar_select %p23, 0, %s22
    %s25 = sadd.s32 1, %s16
    %s26 = scalar_select %p23, %s25, %s16
    %p27 = scmp.ge.s32.totalorder %s26, 2
    %s28 = scalar_select %p27, 0, %s26
    %s29 = ssub.s32 %s17, %s24
    %p30 = scmp.eq.s32.totalorder %s29, 0
    %s32 = sadd.s32 %s31, 1
    %s33 = scalar_select %p30, %s31, %s32
    %p36 = pneg %p30
    %p37 = scmp.eq.s32.totalorder %s9, 1
    %p38 = por %p36, %p37
    %p39 = scmp.ne.s32.totalorder %s31, %s34
    %p40 = scmp.eq.s32.totalorder %s9, 0
    %p41 = por %p39, %p40
    %p42 = scmp.ne.s32.totalorder %s31, %s34
    %p43 = scmp.eq.s32.totalorder %s14, 1
    %p44 = por %p42, %p43
    %p45 = scmp.ne.s32.totalorder %s34, %s35
    %p46 = scmp.eq.s32.totalorder %s14, 0
    %p47 = por %p45, %p46
    %p48 = scmp.ne.s32.totalorder %s34, %s35
    %p49 = scmp.eq.s32.totalorder %s15, 1
    %p50 = por %p48, %p49
    %p52 = scmp.ne.s32.totalorder %s35, %s51
    %p53 = scmp.eq.s32.totalorder %s15, 0
    %p54 = por %p52, %p53
    %s55 = ssub.s32 %s17, %s24
    %p56 = scmp.eq.s32.totalorder %s55, 0
    %s58 = sadd.s32 %s57, 1
    %s59 = scalar_select %p56, %s57, %s58
    %p62 = pneg %p56
    %p63 = scmp.eq.s32.totalorder %s9, 1
    %p64 = por %p62, %p63
    %p65 = scmp.ne.s32.totalorder %s57, %s60
    %p66 = scmp.eq.s32.totalorder %s9, 0
    %p67 = por %p65, %p66
    %p68 = scmp.ne.s32.totalorder %s57, %s60
    %p69 = scmp.eq.s32.totalorder %s14, 1
    %p70 = por %p68, %p69
    %p71 = scmp.ne.s32.totalorder %s60, %s61
    %p72 = scmp.eq.s32.totalorder %s14, 0
    %p73 = por %p71, %p72
    %p74 = scmp.ne.s32.totalorder %s60, %s61
    %p75 = scmp.eq.s32.totalorder %s15, 1
    %p76 = por %p74, %p75
    %p78 = scmp.ne.s32.totalorder %s61, %s77
    %p79 = scmp.eq.s32.totalorder %s15, 0
    %p80 = por %p78, %p79
    %s81 = ssub.s32 %s16, %s28
    %s82 = ssub.s32 %s17, %s24
    %s83 = sor.u32 %s81, %s82
    %p84 = scmp.eq.s32.totalorder %s83, 0
    %s86 = sadd.s32 %s85, 1
    %s87 = scalar_select %p84, %s85, %s86
    %p90 = pneg %p84
    %p91 = scmp.eq.s32.totalorder %s9, 1
    %p92 = por %p90, %p91
    %p93 = scmp.ne.s32.totalorder %s85, %s88
    %p94 = scmp.eq.s32.totalorder %s9, 0
    %p95 = por %p93, %p94
    %p96 = scmp.ne.s32.totalorder %s85, %s88
    %p97 = scmp.eq.s32.totalorder %s14, 1
    %p98 = por %p96, %p97
    %p99 = scmp.ne.s32.totalorder %s88, %s89
    %p100 = scmp.eq.s32.totalorder %s14, 0
    %p101 = por %p99, %p100
    %p102 = scmp.ne.s32.totalorder %s88, %s89
    %p103 = scmp.eq.s32.totalorder %s15, 1
    %p104 = por %p102, %p103
    %p106 = scmp.ne.s32.totalorder %s89, %s105
    %p107 = scmp.eq.s32.totalorder %s15, 0
    %p108 = por %p106, %p107
    %s109 = ssub.s32 %s16, %s28
    %s110 = ssub.s32 %s17, %s24
    %s111 = sor.u32 %s109, %s110
    %p112 = scmp.eq.s32.totalorder %s111, 0
    %s114 = sadd.s32 %s113, 1
    %s115 = scalar_select %p112, %s113, %s114
    %p118 = pneg %p112
    %p119 = scmp.eq.s32.totalorder %s9, 1
    %p120 = por %p118, %p119
    %p121 = scmp.ne.s32.totalorder %s113, %s116
    %p122 = scmp.eq.s32.totalorder %s9, 0
    %p123 = por %p121, %p122
    %p124 = scmp.ne.s32.totalorder %s113, %s116
    %p125 = scmp.eq.s32.totalorder %s14, 1
    %p126 = por %p124, %p125
    %p127 = scmp.ne.s32.totalorder %s116, %s117
    %p128 = scmp.eq.s32.totalorder %s14, 0
    %p129 = por %p127, %p128
    %p130 = scmp.ne.s32.totalorder %s116, %s117
    %p131 = scmp.eq.s32.totalorder %s15, 1
    %p132 = por %p130, %p131
    %p134 = scmp.ne.s32.totalorder %s117, %s133
    %p135 = scmp.eq.s32.totalorder %s15, 0
    %p136 = por %p134, %p135
    %p137 = scmp.le.s32.totalorder 1, %s9
    %p138 = scmp.lt.s32.totalorder %s9, 3
    %p139 = pnand %p137, %p138
    %p140 = pneg %p139
    // Predicated region
    $region9: #{tpu_custom_call.1} parent=5 // pred_check
      _
    $region10: #{tpu_custom_call.1} parent=5 // pred_check_branch
      %142 = sbr.rel (%p139) target = $region12
    $region11: #{tpu_custom_call.1} parent=5 // pred_region
      %s143 = ssub.s32 %s9, 1
      // Predicated region
      $region13: #{tpu_custom_call.1} parent=11 // pred_check
        %p144 = pneg %p47
      $region14: #{tpu_custom_call.1} parent=11 // pred_check_branch
        %146 = sbr.rel (%p144) target = $region16
      $region15: #{tpu_custom_call.1} parent=11 // pred_region
        %p147 = scmp.lt.s32.totalorder %s19, 0
        %s148 = scalar_select %p147, %s19, 0
        %s149 = smul.addr %s148, 8
        %s150 = scalar_lea.vmem %s0, %s149
      $region16: #{tpu_custom_call.1} parent=11 // pred_fallthru
        _
      // Predicated region
      $region17: #{tpu_custom_call.1} parent=11 // pred_check
        %p151 = pneg %p73
      $region18: #{tpu_custom_call.1} parent=11 // pred_check_branch
        %153 = sbr.rel (%p151) target = $region20
      $region19: #{tpu_custom_call.1} parent=11 // pred_region
        %p154 = scmp.lt.s32.totalorder %s19, 0
        %s155 = scalar_select %p154, %s19, 0
        %s156 = scalar_lea.vmem %s1, %s155
      $region20: #{tpu_custom_call.1} parent=11 // pred_fallthru
        _
    $region12: #{tpu_custom_call.1} parent=5 // pred_fallthru
      _
    %p157 = scmp.lt.s32.totalorder %s9, 2
    // Predicated region
    $region21: #{tpu_custom_call.1} parent=5 // pred_check
      %p158 = pneg %p157
    $region22: #{tpu_custom_call.1} parent=5 // pred_check_branch
      %160 = sbr.rel (%p158) target = $region24
    $region23: #{tpu_custom_call.1} parent=5 // pred_region
      // Predicated region
      $region25: #{tpu_custom_call.1} parent=23 // pred_check
        %p161 = pneg %p95
      $region26: #{tpu_custom_call.1} parent=23 // pred_check_branch
        %163 = sbr.rel (%p161) target = $region28
      $region27: #{tpu_custom_call.1} parent=23 // pred_region
        %p164 = scmp.lt.s32.totalorder %s16, 1
        %s165 = scalar_select %p164, %s16, 1
        %p166 = scmp.lt.s32.totalorder %s17, 0
        %s167 = scalar_select %p166, %s17, 0
        %s168 = smul.addr %s165, 32
        %s169 = sadd.s32 %s167, %s168
        %s170 = smul.addr %s169, 8
        %s171 = scalar_lea.vmem %s2, %s170
      $region28: #{tpu_custom_call.1} parent=23 // pred_fallthru
        _
    $region24: #{tpu_custom_call.1} parent=5 // pred_fallthru
      _
    %p172 = scmp.le.s32.totalorder 1, %s9
    %p173 = scmp.lt.s32.totalorder %s9, 3
    %p174 = pnand %p172, %p173
    %p175 = pneg %p174
    // Predicated region
    $region29: #{tpu_custom_call.1} parent=5 // pred_check
      _
    $region30: #{tpu_custom_call.1} parent=5 // pred_check_branch
      %177 = sbr.rel (%p174) target = $region32
    $region31: #{tpu_custom_call.1} parent=5 // pred_region
      %s178 = ssub.s32 %s9, 1
      %p179 = scmp.lt.s32.totalorder %s19, 0
      %s180 = scalar_select %p179, %s19, 0
      %s181 = smul.addr %s180, 8
      %s182 = scalar_lea.vmem %s0, %s181
      %p183 = pneg %p47
      %p184 = pneg %p44
      %p185 = scmp.lt.s32.totalorder %s19, 0
      %s186 = scalar_select %p185, %s19, 0
      %s187 = scalar_lea.vmem %s1, %s186
      %p188 = pneg %p73
      %p189 = pneg %p70
      %p190 = scmp.lt.s32.totalorder %s18, 1
      %s191 = scalar_select %p190, %s18, 1
      %p192 = scmp.lt.s32.totalorder %s19, 0
      %s193 = scalar_select %p192, %s19, 0
      %s194 = smul.addr %s191, 32
      %s195 = sadd.s32 %s193, %s194
      %s196 = smul.addr %s195, 8
      %s197 = scalar_lea.vmem %s2, %s196
      %p198 = pneg %p101
      %p199 = pneg %p98
      %p200 = pneg %p129
      %p201 = pneg %p126
      %p202 = scmp.lt.s32.totalorder %s18, 1
      %s203 = scalar_select %p202, %s18, 1
      %p204 = scmp.lt.s32.totalorder %s19, 0
      %s205 = scalar_select %p204, %s19, 0
      %s206 = smul.addr %s203, 32
      %s207 = sadd.s32 %s205, %s206
      %s208 = smul.addr %s207, 8
      %s209 = scalar_lea.vmem %s3, %s208
      %p210 = scmp.lt.s32.totalorder %s19, 0
      %s211 = scalar_select %p210, %s19, 0
      %s212 = smul.addr %s211, 8
      %s213 = scalar_lea.vmem %s0, %s212
      %p214 = scmp.lt.s32.totalorder %s19, 0
      %s215 = scalar_select %p214, %s19, 0
      %s216 = scalar_lea.vmem %s1, %s215
      %p217 = scmp.lt.s32.totalorder %s18, 1
      %s218 = scalar_select %p217, %s18, 1
      %p219 = scmp.lt.s32.totalorder %s19, 0
      %s220 = scalar_select %p219, %s19, 0
      %s221 = smul.addr %s218, 32
      %s222 = sadd.s32 %s220, %s221
      %s223 = smul.addr %s222, 8
      %s224 = scalar_lea.vmem %s2, %s223
      %p225 = scmp.lt.s32.totalorder %s18, 1
      %s226 = scalar_select %p225, %s18, 1
      %p227 = scmp.lt.s32.totalorder %s19, 0
      %s228 = scalar_select %p227, %s19, 0
      %s229 = smul.addr %s226, 32
      %s230 = sadd.s32 %s228, %s229
      %s231 = smul.addr %s230, 8
      %s232 = scalar_lea.vmem %s3, %s231
      %vm233 = vcmask 31744
      %234 = vst.msk [vmem:[#allocation2] sm:$0xff] %vm233, 0.0
      %235 = vst.msk [vmem:[#allocation2 + $0x8] sm:$0xff] %vm233, 0.0
      %vm236 = vcmask 25600
      %237 = vst.msk [vmem:[#allocation2 + $0x10] sm:$0x3] %vm236, 0.0
      %s238 = scalar_lea.vmem [#allocation2], 408
      %239 = vst.msk [vmem:[%s238] sm:$0xff] %vm233, 0.0
      %240 = vst.msk [vmem:[%s238 + $0x8] sm:$0xff] %vm233, 0.0
      %241 = vst.msk [vmem:[%s238 + $0x10] sm:$0x3] %vm236, 0.0
      %vm242 = vcmask 24576
      %243 = vst.msk [vmem:[#allocation2] sm:$0x1] %vm242, 0.0
      %244 = vst.msk [vmem:[#allocation2 + $0x18] sm:$0x1] %vm242, 0.0
      %245 = vst.msk [vmem:[#allocation2 + $0x30] sm:$0x1] %vm242, 0.0
      %246 = vst.msk [vmem:[#allocation2 + $0x48] sm:$0x1] %vm242, 0.0
      %247 = vst.msk [vmem:[#allocation2 + $0x60] sm:$0x1] %vm242, 0.0
      %248 = vst.msk [vmem:[#allocation2 + $0x78] sm:$0x1] %vm242, 0.0
      %249 = vst.msk [vmem:[#allocation2 + $0x90] sm:$0x1] %vm242, 0.0
      %250 = vst.msk [vmem:[#allocation2 + $0xa8] sm:$0x1] %vm242, 0.0
      %251 = vst.msk [vmem:[#allocation2 + $0xc0] sm:$0x1] %vm242, 0.0
      %252 = vst.msk [vmem:[#allocation2 + $0xd8] sm:$0x1] %vm242, 0.0
      %253 = vst.msk [vmem:[#allocation2 + $0xf0] sm:$0x1] %vm242, 0.0
      %254 = vst.msk [vmem:[#allocation2 + $0x108] sm:$0x1] %vm242, 0.0
      %255 = vst.msk [vmem:[#allocation2 + $0x120] sm:$0x1] %vm242, 0.0
      %256 = vst.msk [vmem:[#allocation2 + $0x138] sm:$0x1] %vm242, 0.0
      %257 = vst.msk [vmem:[#allocation2 + $0x150] sm:$0x1] %vm242, 0.0
      %258 = vst.msk [vmem:[#allocation2 + $0x168] sm:$0x1] %vm242, 0.0
      %259 = vst.msk [vmem:[#allocation2 + $0x180] sm:$0x1] %vm242, 0.0
      %260 = vst.msk [vmem:[#allocation2 + $0x198] sm:$0x1] %vm242, 0.0
      %261 = vst.msk [vmem:[#allocation2 + $0x11] sm:$0x1] %vm242, 0.0
      %262 = vst.msk [vmem:[#allocation2 + $0x29] sm:$0x1] %vm242, 0.0
      %263 = vst.msk [vmem:[#allocation2 + $0x41] sm:$0x1] %vm242, 0.0
      %264 = vst.msk [vmem:[#allocation2 + $0x59] sm:$0x1] %vm242, 0.0
      %265 = vst.msk [vmem:[#allocation2 + $0x71] sm:$0x1] %vm242, 0.0
      %266 = vst.msk [vmem:[#allocation2 + $0x89] sm:$0x1] %vm242, 0.0
      %267 = vst.msk [vmem:[#allocation2 + $0xa1] sm:$0x1] %vm242, 0.0
      %268 = vst.msk [vmem:[#allocation2 + $0xb9] sm:$0x1] %vm242, 0.0
      %269 = vst.msk [vmem:[#allocation2 + $0xd1] sm:$0x1] %vm242, 0.0
      %270 = vst.msk [vmem:[#allocation2 + $0xe9] sm:$0x1] %vm242, 0.0
      %271 = vst.msk [vmem:[#allocation2 + $0x101] sm:$0x1] %vm242, 0.0
      %272 = vst.msk [vmem:[#allocation2 + $0x119] sm:$0x1] %vm242, 0.0
      %273 = vst.msk [vmem:[#allocation2 + $0x131] sm:$0x1] %vm242, 0.0
      %274 = vst.msk [vmem:[#allocation2 + $0x149] sm:$0x1] %vm242, 0.0
      %275 = vst.msk [vmem:[#allocation2 + $0x161] sm:$0x1] %vm242, 0.0
      %276 = vst.msk [vmem:[#allocation2 + $0x179] sm:$0x1] %vm242, 0.0
      %277 = vst.msk [vmem:[#allocation2 + $0x191] sm:$0x1] %vm242, 0.0
      %278 = vst.msk [vmem:[#allocation2 + $0x1a9] sm:$0x1] %vm242, 0.0
      %v279 = vld [vmem:[%s224] sm:$0xff]
      %v280 = vld [vmem:[%s224 + $0x8] sm:$0xff]
      %v281 = vld [vmem:[%s224 + $0x10] sm:$0xff]
      %v282 = vld [vmem:[%s224 + $0x18] sm:$0xff]
      %v283 = vld [vmem:[%s224 + $0x20] sm:$0xff]
      %v284 = vld [vmem:[%s224 + $0x28] sm:$0xff]
      %v285 = vld [vmem:[%s224 + $0x30] sm:$0xff]
      %v286 = vld [vmem:[%s224 + $0x38] sm:$0xff]
      %v287 = vld [vmem:[%s224 + $0x40] sm:$0xff]
      %v288 = vld [vmem:[%s224 + $0x48] sm:$0xff]
      %v289 = vld [vmem:[%s224 + $0x50] sm:$0xff]
      %v290 = vld [vmem:[%s224 + $0x58] sm:$0xff]
      %v291 = vld [vmem:[%s224 + $0x60] sm:$0xff]
      %v292 = vld [vmem:[%s224 + $0x68] sm:$0xff]
      %v293 = vld [vmem:[%s224 + $0x70] sm:$0xff]
      %v294 = vld [vmem:[%s224 + $0x78] sm:$0xff]
      %v295 = vld [vmem:[%s224 + $0x80] sm:$0xff]
      %v296 = vld [vmem:[%s224 + $0x88] sm:$0xff]
      %v297 = vld [vmem:[%s224 + $0x90] sm:$0xff]
      %v298 = vld [vmem:[%s224 + $0x98] sm:$0xff]
      %v299 = vld [vmem:[%s224 + $0xa0] sm:$0xff]
      %v300 = vld [vmem:[%s224 + $0xa8] sm:$0xff]
      %v301 = vld [vmem:[%s224 + $0xb0] sm:$0xff]
      %v302 = vld [vmem:[%s224 + $0xb8] sm:$0xff]
      %v303 = vld [vmem:[%s224 + $0xc0] sm:$0xff]
      %v304 = vld [vmem:[%s224 + $0xc8] sm:$0xff]
      %v305 = vld [vmem:[%s224 + $0xd0] sm:$0xff]
      %v306 = vld [vmem:[%s224 + $0xd8] sm:$0xff]
      %v307 = vld [vmem:[%s224 + $0xe0] sm:$0xff]
      %v308 = vld [vmem:[%s224 + $0xe8] sm:$0xff]
      %v309 = vld [vmem:[%s224 + $0xf0] sm:$0xff]
      %v310 = vld [vmem:[%s224 + $0xf8] sm:$0xff]
      %s311 = scalar_lea.vmem [#allocation2], 24
      %312 = vst.msk [vmem:[%s311 + $0x1] sm:$0xff] %vm233, %v279
      %313 = vst.msk [vmem:[%s311 + $0x9] sm:$0xff] %vm233, %v280
      %314 = vst.msk [vmem:[%s311 + $0x19] sm:$0xff] %vm233, %v281
      %315 = vst.msk [vmem:[%s311 + $0x21] sm:$0xff] %vm233, %v282
      %316 = vst.msk [vmem:[%s311 + $0x31] sm:$0xff] %vm233, %v283
      %317 = vst.msk [vmem:[%s311 + $0x39] sm:$0xff] %vm233, %v284
      %318 = vst.msk [vmem:[%s311 + $0x49] sm:$0xff] %vm233, %v285
      %319 = vst.msk [vmem:[%s311 + $0x51] sm:$0xff] %vm233, %v286
      %320 = vst.msk [vmem:[%s311 + $0x61] sm:$0xff] %vm233, %v287
      %321 = vst.msk [vmem:[%s311 + $0x69] sm:$0xff] %vm233, %v288
      %322 = vst.msk [vmem:[%s311 + $0x79] sm:$0xff] %vm233, %v289
      %323 = vst.msk [vmem:[%s311 + $0x81] sm:$0xff] %vm233, %v290
      %324 = vst.msk [vmem:[%s311 + $0x91] sm:$0xff] %vm233, %v291
      %325 = vst.msk [vmem:[%s311 + $0x99] sm:$0xff] %vm233, %v292
      %326 = vst.msk [vmem:[%s311 + $0xa9] sm:$0xff] %vm233, %v293
      %327 = vst.msk [vmem:[%s311 + $0xb1] sm:$0xff] %vm233, %v294
      %328 = vst.msk [vmem:[%s311 + $0xc1] sm:$0xff] %vm233, %v295
      %329 = vst.msk [vmem:[%s311 + $0xc9] sm:$0xff] %vm233, %v296
      %330 = vst.msk [vmem:[%s311 + $0xd9] sm:$0xff] %vm233, %v297
      %331 = vst.msk [vmem:[%s311 + $0xe1] sm:$0xff] %vm233, %v298
      %332 = vst.msk [vmem:[%s311 + $0xf1] sm:$0xff] %vm233, %v299
      %333 = vst.msk [vmem:[%s311 + $0xf9] sm:$0xff] %vm233, %v300
      %334 = vst.msk [vmem:[%s311 + $0x109] sm:$0xff] %vm233, %v301
      %335 = vst.msk [vmem:[%s311 + $0x111] sm:$0xff] %vm233, %v302
      %336 = vst.msk [vmem:[%s311 + $0x121] sm:$0xff] %vm233, %v303
      %337 = vst.msk [vmem:[%s311 + $0x129] sm:$0xff] %vm233, %v304
      %338 = vst.msk [vmem:[%s311 + $0x139] sm:$0xff] %vm233, %v305
      %339 = vst.msk [vmem:[%s311 + $0x141] sm:$0xff] %vm233, %v306
      %340 = vst.msk [vmem:[%s311 + $0x151] sm:$0xff] %vm233, %v307
      %341 = vst.msk [vmem:[%s311 + $0x159] sm:$0xff] %vm233, %v308
      %342 = vst.msk [vmem:[%s311 + $0x169] sm:$0xff] %vm233, %v309
      %343 = vst.msk [vmem:[%s311 + $0x171] sm:$0xff] %vm233, %v310
      %v344 = vld [vmem:[%s216] sm:$0x1]
      %v346 = vperm.slane %v344, 0
      %v348 = vld [vmem:[%s213] sm:$0x1]
      %v349 = vld [vmem:[#allocation2] sm:$0xff]
      %v350 = vld [vmem:[#allocation2 + $0x8] sm:$0xff]
      %v351 = vld [vmem:[#allocation2 + $0x18] sm:$0xff]
      %v352 = vld [vmem:[#allocation2 + $0x20] sm:$0xff]
      %v353 = vld [vmem:[#allocation2 + $0x30] sm:$0xff]
      %v354 = vld [vmem:[#allocation2 + $0x38] sm:$0xff]
      %v355 = vld [vmem:[#allocation2 + $0x48] sm:$0xff]
      %v356 = vld [vmem:[#allocation2 + $0x50] sm:$0xff]
      %v357 = vld [vmem:[#allocation2 + $0x60] sm:$0xff]
      %v358 = vld [vmem:[#allocation2 + $0x68] sm:$0xff]
      %v359 = vld [vmem:[#allocation2 + $0x78] sm:$0xff]
      %v360 = vld [vmem:[#allocation2 + $0x80] sm:$0xff]
      %v361 = vld [vmem:[#allocation2 + $0x90] sm:$0xff]
      %v362 = vld [vmem:[#allocation2 + $0x98] sm:$0xff]
      %v363 = vld [vmem:[#allocation2 + $0xa8] sm:$0xff]
      %v364 = vld [vmem:[#allocation2 + $0xb0] sm:$0xff]
      %v365 = vld [vmem:[#allocation2 + $0xc0] sm:$0xff]
      %v366 = vld [vmem:[#allocation2 + $0xc8] sm:$0xff]
      %v367 = vld [vmem:[#allocation2 + $0xd8] sm:$0xff]
      %v368 = vld [vmem:[#allocation2 + $0xe0] sm:$0xff]
      %v369 = vld [vmem:[#allocation2 + $0xf0] sm:$0xff]
      %v370 = vld [vmem:[#allocation2 + $0xf8] sm:$0xff]
      %v371 = vld [vmem:[#allocation2 + $0x108] sm:$0xff]
      %v372 = vld [vmem:[#allocation2 + $0x110] sm:$0xff]
      %v373 = vld [vmem:[#allocation2 + $0x120] sm:$0xff]
      %v374 = vld [vmem:[#allocation2 + $0x128] sm:$0xff]
      %v375 = vld [vmem:[#allocation2 + $0x138] sm:$0xff]
      %v376 = vld [vmem:[#allocation2 + $0x140] sm:$0xff]
      %v377 = vld [vmem:[#allocation2 + $0x150] sm:$0xff]
      %v378 = vld [vmem:[#allocation2 + $0x158] sm:$0xff]
      %v379 = vld [vmem:[#allocation2 + $0x168] sm:$0xff]
      %v380 = vld [vmem:[#allocation2 + $0x170] sm:$0xff]
      %v381 = vperm.slane %v348, 0
      %v382 = vmul.f32 %v381, %v349
      %v383 = vmul.f32 %v381, %v350
      %v384 = vmul.f32 %v381, %v351
      %v385 = vmul.f32 %v381, %v352
      %v386 = vmul.f32 %v381, %v353
      %v387 = vmul.f32 %v381, %v354
      %v388 = vmul.f32 %v381, %v355
      %v389 = vmul.f32 %v381, %v356
      %v390 = vmul.f32 %v381, %v357
      %v391 = vmul.f32 %v381, %v358
      %v392 = vmul.f32 %v381, %v359
      %v393 = vmul.f32 %v381, %v360
      %v394 = vmul.f32 %v381, %v361
      %v395 = vmul.f32 %v381, %v362
      %v396 = vmul.f32 %v381, %v363
      %v397 = vmul.f32 %v381, %v364
      %v398 = vmul.f32 %v381, %v365
      %v399 = vmul.f32 %v381, %v366
      %v400 = vmul.f32 %v381, %v367
      %v401 = vmul.f32 %v381, %v368
      %v402 = vmul.f32 %v381, %v369
      %v403 = vmul.f32 %v381, %v370
      %v404 = vmul.f32 %v381, %v371
      %v405 = vmul.f32 %v381, %v372
      %v406 = vmul.f32 %v381, %v373
      %v407 = vmul.f32 %v381, %v374
      %v408 = vmul.f32 %v381, %v375
      %v409 = vmul.f32 %v381, %v376
      %v410 = vmul.f32 %v381, %v377
      %v411 = vmul.f32 %v381, %v378
      %v412 = vmul.f32 %v381, %v379
      %v413 = vmul.f32 %v381, %v380
      %v414 = vadd.f32 %v346, %v382
      %v415 = vadd.f32 %v346, %v383
      %v416 = vadd.f32 %v346, %v384
      %v417 = vadd.f32 %v346, %v385
      %v418 = vadd.f32 %v346, %v386
      %v419 = vadd.f32 %v346, %v387
      %v420 = vadd.f32 %v346, %v388
      %v421 = vadd.f32 %v346, %v389
      %v422 = vadd.f32 %v346, %v390
      %v423 = vadd.f32 %v346, %v391
      %v424 = vadd.f32 %v346, %v392
      %v425 = vadd.f32 %v346, %v393
      %v426 = vadd.f32 %v346, %v394
      %v427 = vadd.f32 %v346, %v395
      %v428 = vadd.f32 %v346, %v396
      %v429 = vadd.f32 %v346, %v397
      %v430 = vadd.f32 %v346, %v398
      %v431 = vadd.f32 %v346, %v399
      %v432 = vadd.f32 %v346, %v400
      %v433 = vadd.f32 %v346, %v401
      %v434 = vadd.f32 %v346, %v402
      %v435 = vadd.f32 %v346, %v403
      %v436 = vadd.f32 %v346, %v404
      %v437 = vadd.f32 %v346, %v405
      %v438 = vadd.f32 %v346, %v406
      %v439 = vadd.f32 %v346, %v407
      %v440 = vadd.f32 %v346, %v408
      %v441 = vadd.f32 %v346, %v409
      %v442 = vadd.f32 %v346, %v410
      %v443 = vadd.f32 %v346, %v411
      %v444 = vadd.f32 %v346, %v412
      %v445 = vadd.f32 %v346, %v413
      %v446 = vld [vmem:[%s213 + $0x1] sm:$0x1]
      %v447 = vld [vmem:[#allocation2 + $0x1] sm:$0xff]
      %v448 = vld [vmem:[#allocation2 + $0x9] sm:$0xff]
      %v449 = vld [vmem:[#allocation2 + $0x19] sm:$0xff]
      %v450 = vld [vmem:[#allocation2 + $0x21] sm:$0xff]
      %v451 = vld [vmem:[#allocation2 + $0x31] sm:$0xff]
      %v452 = vld [vmem:[#allocation2 + $0x39] sm:$0xff]
      %v453 = vld [vmem:[#allocation2 + $0x49] sm:$0xff]
      %v454 = vld [vmem:[#allocation2 + $0x51] sm:$0xff]
      %v455 = vld [vmem:[#allocation2 + $0x61] sm:$0xff]
      %v456 = vld [vmem:[#allocation2 + $0x69] sm:$0xff]
      %v457 = vld [vmem:[#allocation2 + $0x79] sm:$0xff]
      %v458 = vld [vmem:[#allocation2 + $0x81] sm:$0xff]
      %v459 = vld [vmem:[#allocation2 + $0x91] sm:$0xff]
      %v460 = vld [vmem:[#allocation2 + $0x99] sm:$0xff]
      %v461 = vld [vmem:[#allocation2 + $0xa9] sm:$0xff]
      %v462 = vld [vmem:[#allocation2 + $0xb1] sm:$0xff]
      %v463 = vld [vmem:[#allocation2 + $0xc1] sm:$0xff]
      %v464 = vld [vmem:[#allocation2 + $0xc9] sm:$0xff]
      %v465 = vld [vmem:[#allocation2 + $0xd9] sm:$0xff]
      %v466 = vld [vmem:[#allocation2 + $0xe1] sm:$0xff]
      %v467 = vld [vmem:[#allocation2 + $0xf1] sm:$0xff]
      %v468 = vld [vmem:[#allocation2 + $0xf9] sm:$0xff]
      %v469 = vld [vmem:[#allocation2 + $0x109] sm:$0xff]
      %v470 = vld [vmem:[#allocation2 + $0x111] sm:$0xff]
      %v471 = vld [vmem:[#allocation2 + $0x121] sm:$0xff]
      %v472 = vld [vmem:[#allocation2 + $0x129] sm:$0xff]
      %v473 = vld [vmem:[#allocation2 + $0x139] sm:$0xff]
      %v474 = vld [vmem:[#allocation2 + $0x141] sm:$0xff]
      %v475 = vld [vmem:[#allocation2 + $0x151] sm:$0xff]
      %v476 = vld [vmem:[#allocation2 + $0x159] sm:$0xff]
      %v477 = vld [vmem:[#allocation2 + $0x169] sm:$0xff]
      %v478 = vld [vmem:[#allocation2 + $0x171] sm:$0xff]
      %v479 = vperm.slane %v446, 0
      %v480 = vmul.f32 %v479, %v447
      %v481 = vmul.f32 %v479, %v448
      %v482 = vmul.f32 %v479, %v449
      %v483 = vmul.f32 %v479, %v450
      %v484 = vmul.f32 %v479, %v451
      %v485 = vmul.f32 %v479, %v452
      %v486 = vmul.f32 %v479, %v453
      %v487 = vmul.f32 %v479, %v454
      %v488 = vmul.f32 %v479, %v455
      %v489 = vmul.f32 %v479, %v456
      %v490 = vmul.f32 %v479, %v457
      %v491 = vmul.f32 %v479, %v458
      %v492 = vmul.f32 %v479, %v459
      %v493 = vmul.f32 %v479, %v460
      %v494 = vmul.f32 %v479, %v461
      %v495 = vmul.f32 %v479, %v462
      %v496 = vmul.f32 %v479, %v463
      %v497 = vmul.f32 %v479, %v464
      %v498 = vmul.f32 %v479, %v465
      %v499 = vmul.f32 %v479, %v466
      %v500 = vmul.f32 %v479, %v467
      %v501 = vmul.f32 %v479, %v468
      %v502 = vmul.f32 %v479, %v469
      %v503 = vmul.f32 %v479, %v470
      %v504 = vmul.f32 %v479, %v471
      %v505 = vmul.f32 %v479, %v472
      %v506 = vmul.f32 %v479, %v473
      %v507 = vmul.f32 %v479, %v474
      %v508 = vmul.f32 %v479, %v475
      %v509 = vmul.f32 %v479, %v476
      %v510 = vmul.f32 %v479, %v477
      %v511 = vmul.f32 %v479, %v478
      %v512 = vadd.f32 %v414, %v480
      %v513 = vadd.f32 %v415, %v481
      %v514 = vadd.f32 %v416, %v482
      %v515 = vadd.f32 %v417, %v483
      %v516 = vadd.f32 %v418, %v484
      %v517 = vadd.f32 %v419, %v485
      %v518 = vadd.f32 %v420, %v486
      %v519 = vadd.f32 %v421, %v487
      %v520 = vadd.f32 %v422, %v488
      %v521 = vadd.f32 %v423, %v489
      %v522 = vadd.f32 %v424, %v490
      %v523 = vadd.f32 %v425, %v491
      %v524 = vadd.f32 %v426, %v492
      %v525 = vadd.f32 %v427, %v493
      %v526 = vadd.f32 %v428, %v494
      %v527 = vadd.f32 %v429, %v495
      %v528 = vadd.f32 %v430, %v496
      %v529 = vadd.f32 %v431, %v497
      %v530 = vadd.f32 %v432, %v498
      %v531 = vadd.f32 %v433, %v499
      %v532 = vadd.f32 %v434, %v500
      %v533 = vadd.f32 %v435, %v501
      %v534 = vadd.f32 %v436, %v502
      %v535 = vadd.f32 %v437, %v503
      %v536 = vadd.f32 %v438, %v504
      %v537 = vadd.f32 %v439, %v505
      %v538 = vadd.f32 %v440, %v506
      %v539 = vadd.f32 %v441, %v507
      %v540 = vadd.f32 %v442, %v508
      %v541 = vadd.f32 %v443, %v509
      %v542 = vadd.f32 %v444, %v510
      %v543 = vadd.f32 %v445, %v511
      %v544 = vld [vmem:[%s213 + $0x2] sm:$0x1]
      %v545 = vld [vmem:[#allocation2 + $0x2] sm:$0xff]
      %v546 = vld [vmem:[#allocation2 + $0xa] sm:$0xff]
      %v547 = vld [vmem:[#allocation2 + $0x1a] sm:$0xff]
      %v548 = vld [vmem:[#allocation2 + $0x22] sm:$0xff]
      %v549 = vld [vmem:[#allocation2 + $0x32] sm:$0xff]
      %v550 = vld [vmem:[#allocation2 + $0x3a] sm:$0xff]
      %v551 = vld [vmem:[#allocation2 + $0x4a] sm:$0xff]
      %v552 = vld [vmem:[#allocation2 + $0x52] sm:$0xff]
      %v553 = vld [vmem:[#allocation2 + $0x62] sm:$0xff]
      %v554 = vld [vmem:[#allocation2 + $0x6a] sm:$0xff]
      %v555 = vld [vmem:[#allocation2 + $0x7a] sm:$0xff]
      %v556 = vld [vmem:[#allocation2 + $0x82] sm:$0xff]
      %v557 = vld [vmem:[#allocation2 + $0x92] sm:$0xff]
      %v558 = vld [vmem:[#allocation2 + $0x9a] sm:$0xff]
      %v559 = vld [vmem:[#allocation2 + $0xaa] sm:$0xff]
      %v560 = vld [vmem:[#allocation2 + $0xb2] sm:$0xff]
      %v561 = vld [vmem:[#allocation2 + $0xc2] sm:$0xff]
      %v562 = vld [vmem:[#allocation2 + $0xca] sm:$0xff]
      %v563 = vld [vmem:[#allocation2 + $0xda] sm:$0xff]
      %v564 = vld [vmem:[#allocation2 + $0xe2] sm:$0xff]
      %v565 = vld [vmem:[#allocation2 + $0xf2] sm:$0xff]
      %v566 = vld [vmem:[#allocation2 + $0xfa] sm:$0xff]
      %v567 = vld [vmem:[#allocation2 + $0x10a] sm:$0xff]
      %v568 = vld [vmem:[#allocation2 + $0x112] sm:$0xff]
      %v569 = vld [vmem:[#allocation2 + $0x122] sm:$0xff]
      %v570 = vld [vmem:[#allocation2 + $0x12a] sm:$0xff]
      %v571 = vld [vmem:[#allocation2 + $0x13a] sm:$0xff]
      %v572 = vld [vmem:[#allocation2 + $0x142] sm:$0xff]
      %v573 = vld [vmem:[#allocation2 + $0x152] sm:$0xff]
      %v574 = vld [vmem:[#allocation2 + $0x15a] sm:$0xff]
      %v575 = vld [vmem:[#allocation2 + $0x16a] sm:$0xff]
      %v576 = vld [vmem:[#allocation2 + $0x172] sm:$0xff]
      %v577 = vperm.slane %v544, 0
      %v578 = vmul.f32 %v577, %v545
      %v579 = vmul.f32 %v577, %v546
      %v580 = vmul.f32 %v577, %v547
      %v581 = vmul.f32 %v577, %v548
      %v582 = vmul.f32 %v577, %v549
      %v583 = vmul.f32 %v577, %v550
      %v584 = vmul.f32 %v577, %v551
      %v585 = vmul.f32 %v577, %v552
      %v586 = vmul.f32 %v577, %v553
      %v587 = vmul.f32 %v577, %v554
      %v588 = vmul.f32 %v577, %v555
      %v589 = vmul.f32 %v577, %v556
      %v590 = vmul.f32 %v577, %v557
      %v591 = vmul.f32 %v577, %v558
      %v592 = vmul.f32 %v577, %v559
      %v593 = vmul.f32 %v577, %v560
      %v594 = vmul.f32 %v577, %v561
      %v595 = vmul.f32 %v577, %v562
      %v596 = vmul.f32 %v577, %v563
      %v597 = vmul.f32 %v577, %v564
      %v598 = vmul.f32 %v577, %v565
      %v599 = vmul.f32 %v577, %v566
      %v600 = vmul.f32 %v577, %v567
      %v601 = vmul.f32 %v577, %v568
      %v602 = vmul.f32 %v577, %v569
      %v603 = vmul.f32 %v577, %v570
      %v604 = vmul.f32 %v577, %v571
      %v605 = vmul.f32 %v577, %v572
      %v606 = vmul.f32 %v577, %v573
      %v607 = vmul.f32 %v577, %v574
      %v608 = vmul.f32 %v577, %v575
      %v609 = vmul.f32 %v577, %v576
      %v610 = vadd.f32 %v512, %v578
      %v611 = vadd.f32 %v513, %v579
      %v612 = vadd.f32 %v514, %v580
      %v613 = vadd.f32 %v515, %v581
      %v614 = vadd.f32 %v516, %v582
      %v615 = vadd.f32 %v517, %v583
      %v616 = vadd.f32 %v518, %v584
      %v617 = vadd.f32 %v519, %v585
      %v618 = vadd.f32 %v520, %v586
      %v619 = vadd.f32 %v521, %v587
      %v620 = vadd.f32 %v522, %v588
      %v621 = vadd.f32 %v523, %v589
      %v622 = vadd.f32 %v524, %v590
      %v623 = vadd.f32 %v525, %v591
      %v624 = vadd.f32 %v526, %v592
      %v625 = vadd.f32 %v527, %v593
      %v626 = vadd.f32 %v528, %v594
      %v627 = vadd.f32 %v529, %v595
      %v628 = vadd.f32 %v530, %v596
      %v629 = vadd.f32 %v531, %v597
      %v630 = vadd.f32 %v532, %v598
      %v631 = vadd.f32 %v533, %v599
      %v632 = vadd.f32 %v534, %v600
      %v633 = vadd.f32 %v535, %v601
      %v634 = vadd.f32 %v536, %v602
      %v635 = vadd.f32 %v537, %v603
      %v636 = vadd.f32 %v538, %v604
      %v637 = vadd.f32 %v539, %v605
      %v638 = vadd.f32 %v540, %v606
      %v639 = vadd.f32 %v541, %v607
      %v640 = vadd.f32 %v542, %v608
      %v641 = vadd.f32 %v543, %v609
      %v642 = vld [vmem:[%s213 + $0x3] sm:$0x1]
      %v643 = vld [vmem:[%s311] sm:$0xff]
      %v644 = vld [vmem:[%s311 + $0x8] sm:$0xff]
      %v645 = vld [vmem:[%s311 + $0x18] sm:$0xff]
      %v646 = vld [vmem:[%s311 + $0x20] sm:$0xff]
      %v647 = vld [vmem:[%s311 + $0x30] sm:$0xff]
      %v648 = vld [vmem:[%s311 + $0x38] sm:$0xff]
      %v649 = vld [vmem:[%s311 + $0x48] sm:$0xff]
      %v650 = vld [vmem:[%s311 + $0x50] sm:$0xff]
      %v651 = vld [vmem:[%s311 + $0x60] sm:$0xff]
      %v652 = vld [vmem:[%s311 + $0x68] sm:$0xff]
      %v653 = vld [vmem:[%s311 + $0x78] sm:$0xff]
      %v654 = vld [vmem:[%s311 + $0x80] sm:$0xff]
      %v655 = vld [vmem:[%s311 + $0x90] sm:$0xff]
      %v656 = vld [vmem:[%s311 + $0x98] sm:$0xff]
      %v657 = vld [vmem:[%s311 + $0xa8] sm:$0xff]
      %v658 = vld [vmem:[%s311 + $0xb0] sm:$0xff]
      %v659 = vld [vmem:[%s311 + $0xc0] sm:$0xff]
      %v660 = vld [vmem:[%s311 + $0xc8] sm:$0xff]
      %v661 = vld [vmem:[%s311 + $0xd8] sm:$0xff]
      %v662 = vld [vmem:[%s311 + $0xe0] sm:$0xff]
      %v663 = vld [vmem:[%s311 + $0xf0] sm:$0xff]
      %v664 = vld [vmem:[%s311 + $0xf8] sm:$0xff]
      %v665 = vld [vmem:[%s311 + $0x108] sm:$0xff]
      %v666 = vld [vmem:[%s311 + $0x110] sm:$0xff]
      %v667 = vld [vmem:[%s311 + $0x120] sm:$0xff]
      %v668 = vld [vmem:[%s311 + $0x128] sm:$0xff]
      %v669 = vld [vmem:[%s311 + $0x138] sm:$0xff]
      %v670 = vld [vmem:[%s311 + $0x140] sm:$0xff]
      %v671 = vld [vmem:[%s311 + $0x150] sm:$0xff]
      %v672 = vld [vmem:[%s311 + $0x158] sm:$0xff]
      %v673 = vld [vmem:[%s311 + $0x168] sm:$0xff]
      %v674 = vld [vmem:[%s311 + $0x170] sm:$0xff]
      %v675 = vperm.slane %v642, 0
      %v676 = vmul.f32 %v675, %v643
      %v677 = vmul.f32 %v675, %v644
      %v678 = vmul.f32 %v675, %v645
      %v679 = vmul.f32 %v675, %v646
      %v680 = vmul.f32 %v675, %v647
      %v681 = vmul.f32 %v675, %v648
      %v682 = vmul.f32 %v675, %v649
      %v683 = vmul.f32 %v675, %v650
      %v684 = vmul.f32 %v675, %v651
      %v685 = vmul.f32 %v675, %v652
      %v686 = vmul.f32 %v675, %v653
      %v687 = vmul.f32 %v675, %v654
      %v688 = vmul.f32 %v675, %v655
      %v689 = vmul.f32 %v675, %v656
      %v690 = vmul.f32 %v675, %v657
      %v691 = vmul.f32 %v675, %v658
      %v692 = vmul.f32 %v675, %v659
      %v693 = vmul.f32 %v675, %v660
      %v694 = vmul.f32 %v675, %v661
      %v695 = vmul.f32 %v675, %v662
      %v696 = vmul.f32 %v675, %v663
      %v697 = vmul.f32 %v675, %v664
      %v698 = vmul.f32 %v675, %v665
      %v699 = vmul.f32 %v675, %v666
      %v700 = vmul.f32 %v675, %v667
      %v701 = vmul.f32 %v675, %v668
      %v702 = vmul.f32 %v675, %v669
      %v703 = vmul.f32 %v675, %v670
      %v704 = vmul.f32 %v675, %v671
      %v705 = vmul.f32 %v675, %v672
      %v706 = vmul.f32 %v675, %v673
      %v707 = vmul.f32 %v675, %v674
      %v708 = vadd.f32 %v610, %v676
      %v709 = vadd.f32 %v611, %v677
      %v710 = vadd.f32 %v612, %v678
      %v711 = vadd.f32 %v613, %v679
      %v712 = vadd.f32 %v614, %v680
      %v713 = vadd.f32 %v615, %v681
      %v714 = vadd.f32 %v616, %v682
      %v715 = vadd.f32 %v617, %v683
      %v716 = vadd.f32 %v618, %v684
      %v717 = vadd.f32 %v619, %v685
      %v718 = vadd.f32 %v620, %v686
      %v719 = vadd.f32 %v621, %v687
      %v720 = vadd.f32 %v622, %v688
      %v721 = vadd.f32 %v623, %v689
      %v722 = vadd.f32 %v624, %v690
      %v723 = vadd.f32 %v625, %v691
      %v724 = vadd.f32 %v626, %v692
      %v725 = vadd.f32 %v627, %v693
      %v726 = vadd.f32 %v628, %v694
      %v727 = vadd.f32 %v629, %v695
      %v728 = vadd.f32 %v630, %v696
      %v729 = vadd.f32 %v631, %v697
      %v730 = vadd.f32 %v632, %v698
      %v731 = vadd.f32 %v633, %v699
      %v732 = vadd.f32 %v634, %v700
      %v733 = vadd.f32 %v635, %v701
      %v734 = vadd.f32 %v636, %v702
      %v735 = vadd.f32 %v637, %v703
      %v736 = vadd.f32 %v638, %v704
      %v737 = vadd.f32 %v639, %v705
      %v738 = vadd.f32 %v640, %v706
      %v739 = vadd.f32 %v641, %v707
      %v740 = vld [vmem:[%s213 + $0x4] sm:$0x1]
      %v741 = vld [vmem:[%s311 + $0x1] sm:$0xff]
      %v742 = vld [vmem:[%s311 + $0x9] sm:$0xff]
      %v743 = vld [vmem:[%s311 + $0x19] sm:$0xff]
      %v744 = vld [vmem:[%s311 + $0x21] sm:$0xff]
      %v745 = vld [vmem:[%s311 + $0x31] sm:$0xff]
      %v746 = vld [vmem:[%s311 + $0x39] sm:$0xff]
      %v747 = vld [vmem:[%s311 + $0x49] sm:$0xff]
      %v748 = vld [vmem:[%s311 + $0x51] sm:$0xff]
      %v749 = vld [vmem:[%s311 + $0x61] sm:$0xff]
      %v750 = vld [vmem:[%s311 + $0x69] sm:$0xff]
      %v751 = vld [vmem:[%s311 + $0x79] sm:$0xff]
      %v752 = vld [vmem:[%s311 + $0x81] sm:$0xff]
      %v753 = vld [vmem:[%s311 + $0x91] sm:$0xff]
      %v754 = vld [vmem:[%s311 + $0x99] sm:$0xff]
      %v755 = vld [vmem:[%s311 + $0xa9] sm:$0xff]
      %v756 = vld [vmem:[%s311 + $0xb1] sm:$0xff]
      %v757 = vld [vmem:[%s311 + $0xc1] sm:$0xff]
      %v758 = vld [vmem:[%s311 + $0xc9] sm:$0xff]
      %v759 = vld [vmem:[%s311 + $0xd9] sm:$0xff]
      %v760 = vld [vmem:[%s311 + $0xe1] sm:$0xff]
      %v761 = vld [vmem:[%s311 + $0xf1] sm:$0xff]
      %v762 = vld [vmem:[%s311 + $0xf9] sm:$0xff]
      %v763 = vld [vmem:[%s311 + $0x109] sm:$0xff]
      %v764 = vld [vmem:[%s311 + $0x111] sm:$0xff]
      %v765 = vld [vmem:[%s311 + $0x121] sm:$0xff]
      %v766 = vld [vmem:[%s311 + $0x129] sm:$0xff]
      %v767 = vld [vmem:[%s311 + $0x139] sm:$0xff]
      %v768 = vld [vmem:[%s311 + $0x141] sm:$0xff]
      %v769 = vld [vmem:[%s311 + $0x151] sm:$0xff]
      %v770 = vld [vmem:[%s311 + $0x159] sm:$0xff]
      %v771 = vld [vmem:[%s311 + $0x169] sm:$0xff]
      %v772 = vld [vmem:[%s311 + $0x171] sm:$0xff]
      %v773 = vperm.slane %v740, 0
      %v774 = vmul.f32 %v773, %v741
      %v775 = vmul.f32 %v773, %v742
      %v776 = vmul.f32 %v773, %v743
      %v777 = vmul.f32 %v773, %v744
      %v778 = vmul.f32 %v773, %v745
      %v779 = vmul.f32 %v773, %v746
      %v780 = vmul.f32 %v773, %v747
      %v781 = vmul.f32 %v773, %v748
      %v782 = vmul.f32 %v773, %v749
      %v783 = vmul.f32 %v773, %v750
      %v784 = vmul.f32 %v773, %v751
      %v785 = vmul.f32 %v773, %v752
      %v786 = vmul.f32 %v773, %v753
      %v787 = vmul.f32 %v773, %v754
      %v788 = vmul.f32 %v773, %v755
      %v789 = vmul.f32 %v773, %v756
      %v790 = vmul.f32 %v773, %v757
      %v791 = vmul.f32 %v773, %v758
      %v792 = vmul.f32 %v773, %v759
      %v793 = vmul.f32 %v773, %v760
      %v794 = vmul.f32 %v773, %v761
      %v795 = vmul.f32 %v773, %v762
      %v796 = vmul.f32 %v773, %v763
      %v797 = vmul.f32 %v773, %v764
      %v798 = vmul.f32 %v773, %v765
      %v799 = vmul.f32 %v773, %v766
      %v800 = vmul.f32 %v773, %v767
      %v801 = vmul.f32 %v773, %v768
      %v802 = vmul.f32 %v773, %v769
      %v803 = vmul.f32 %v773, %v770
      %v804 = vmul.f32 %v773, %v771
      %v805 = vmul.f32 %v773, %v772
      %v806 = vadd.f32 %v708, %v774
      %v807 = vadd.f32 %v709, %v775
      %v808 = vadd.f32 %v710, %v776
      %v809 = vadd.f32 %v711, %v777
      %v810 = vadd.f32 %v712, %v778
      %v811 = vadd.f32 %v713, %v779
      %v812 = vadd.f32 %v714, %v780
      %v813 = vadd.f32 %v715, %v781
      %v814 = vadd.f32 %v716, %v782
      %v815 = vadd.f32 %v717, %v783
      %v816 = vadd.f32 %v718, %v784
      %v817 = vadd.f32 %v719, %v785
      %v818 = vadd.f32 %v720, %v786
      %v819 = vadd.f32 %v721, %v787
      %v820 = vadd.f32 %v722, %v788
      %v821 = vadd.f32 %v723, %v789
      %v822 = vadd.f32 %v724, %v790
      %v823 = vadd.f32 %v725, %v791
      %v824 = vadd.f32 %v726, %v792
      %v825 = vadd.f32 %v727, %v793
      %v826 = vadd.f32 %v728, %v794
      %v827 = vadd.f32 %v729, %v795
      %v828 = vadd.f32 %v730, %v796
      %v829 = vadd.f32 %v731, %v797
      %v830 = vadd.f32 %v732, %v798
      %v831 = vadd.f32 %v733, %v799
      %v832 = vadd.f32 %v734, %v800
      %v833 = vadd.f32 %v735, %v801
      %v834 = vadd.f32 %v736, %v802
      %v835 = vadd.f32 %v737, %v803
      %v836 = vadd.f32 %v738, %v804
      %v837 = vadd.f32 %v739, %v805
      %v838 = vld [vmem:[%s213 + $0x5] sm:$0x1]
      %v839 = vld [vmem:[%s311 + $0x2] sm:$0xff]
      %v840 = vld [vmem:[%s311 + $0xa] sm:$0xff]
      %v841 = vld [vmem:[%s311 + $0x1a] sm:$0xff]
      %v842 = vld [vmem:[%s311 + $0x22] sm:$0xff]
      %v843 = vld [vmem:[%s311 + $0x32] sm:$0xff]
      %v844 = vld [vmem:[%s311 + $0x3a] sm:$0xff]
      %v845 = vld [vmem:[%s311 + $0x4a] sm:$0xff]
      %v846 = vld [vmem:[%s311 + $0x52] sm:$0xff]
      %v847 = vld [vmem:[%s311 + $0x62] sm:$0xff]
      %v848 = vld [vmem:[%s311 + $0x6a] sm:$0xff]
      %v849 = vld [vmem:[%s311 + $0x7a] sm:$0xff]
      %v850 = vld [vmem:[%s311 + $0x82] sm:$0xff]
      %v851 = vld [vmem:[%s311 + $0x92] sm:$0xff]
      %v852 = vld [vmem:[%s311 + $0x9a] sm:$0xff]
      %v853 = vld [vmem:[%s311 + $0xaa] sm:$0xff]
      %v854 = vld [vmem:[%s311 + $0xb2] sm:$0xff]
      %v855 = vld [vmem:[%s311 + $0xc2] sm:$0xff]
      %v856 = vld [vmem:[%s311 + $0xca] sm:$0xff]
      %v857 = vld [vmem:[%s311 + $0xda] sm:$0xff]
      %v858 = vld [vmem:[%s311 + $0xe2] sm:$0xff]
      %v859 = vld [vmem:[%s311 + $0xf2] sm:$0xff]
      %v860 = vld [vmem:[%s311 + $0xfa] sm:$0xff]
      %v861 = vld [vmem:[%s311 + $0x10a] sm:$0xff]
      %v862 = vld [vmem:[%s311 + $0x112] sm:$0xff]
      %v863 = vld [vmem:[%s311 + $0x122] sm:$0xff]
      %v864 = vld [vmem:[%s311 + $0x12a] sm:$0xff]
      %v865 = vld [vmem:[%s311 + $0x13a] sm:$0xff]
      %v866 = vld [vmem:[%s311 + $0x142] sm:$0xff]
      %v867 = vld [vmem:[%s311 + $0x152] sm:$0xff]
      %v868 = vld [vmem:[%s311 + $0x15a] sm:$0xff]
      %v869 = vld [vmem:[%s311 + $0x16a] sm:$0xff]
      %v870 = vld [vmem:[%s311 + $0x172] sm:$0xff]
      %v871 = vperm.slane %v838, 0
      %v872 = vmul.f32 %v871, %v839
      %v873 = vmul.f32 %v871, %v840
      %v874 = vmul.f32 %v871, %v841
      %v875 = vmul.f32 %v871, %v842
      %v876 = vmul.f32 %v871, %v843
      %v877 = vmul.f32 %v871, %v844
      %v878 = vmul.f32 %v871, %v845
      %v879 = vmul.f32 %v871, %v846
      %v880 = vmul.f32 %v871, %v847
      %v881 = vmul.f32 %v871, %v848
      %v882 = vmul.f32 %v871, %v849
      %v883 = vmul.f32 %v871, %v850
      %v884 = vmul.f32 %v871, %v851
      %v885 = vmul.f32 %v871, %v852
      %v886 = vmul.f32 %v871, %v853
      %v887 = vmul.f32 %v871, %v854
      %v888 = vmul.f32 %v871, %v855
      %v889 = vmul.f32 %v871, %v856
      %v890 = vmul.f32 %v871, %v857
      %v891 = vmul.f32 %v871, %v858
      %v892 = vmul.f32 %v871, %v859
      %v893 = vmul.f32 %v871, %v860
      %v894 = vmul.f32 %v871, %v861
      %v895 = vmul.f32 %v871, %v862
      %v896 = vmul.f32 %v871, %v863
      %v897 = vmul.f32 %v871, %v864
      %v898 = vmul.f32 %v871, %v865
      %v899 = vmul.f32 %v871, %v866
      %v900 = vmul.f32 %v871, %v867
      %v901 = vmul.f32 %v871, %v868
      %v902 = vmul.f32 %v871, %v869
      %v903 = vmul.f32 %v871, %v870
      %v904 = vadd.f32 %v806, %v872
      %v905 = vadd.f32 %v807, %v873
      %v906 = vadd.f32 %v808, %v874
      %v907 = vadd.f32 %v809, %v875
      %v908 = vadd.f32 %v810, %v876
      %v909 = vadd.f32 %v811, %v877
      %v910 = vadd.f32 %v812, %v878
      %v911 = vadd.f32 %v813, %v879
      %v912 = vadd.f32 %v814, %v880
      %v913 = vadd.f32 %v815, %v881
      %v914 = vadd.f32 %v816, %v882
      %v915 = vadd.f32 %v817, %v883
      %v916 = vadd.f32 %v818, %v884
      %v917 = vadd.f32 %v819, %v885
      %v918 = vadd.f32 %v820, %v886
      %v919 = vadd.f32 %v821, %v887
      %v920 = vadd.f32 %v822, %v888
      %v921 = vadd.f32 %v823, %v889
      %v922 = vadd.f32 %v824, %v890
      %v923 = vadd.f32 %v825, %v891
      %v924 = vadd.f32 %v826, %v892
      %v925 = vadd.f32 %v827, %v893
      %v926 = vadd.f32 %v828, %v894
      %v927 = vadd.f32 %v829, %v895
      %v928 = vadd.f32 %v830, %v896
      %v929 = vadd.f32 %v831, %v897
      %v930 = vadd.f32 %v832, %v898
      %v931 = vadd.f32 %v833, %v899
      %v932 = vadd.f32 %v834, %v900
      %v933 = vadd.f32 %v835, %v901
      %v934 = vadd.f32 %v836, %v902
      %v935 = vadd.f32 %v837, %v903
      %v936 = vld [vmem:[%s213 + $0x6] sm:$0x1]
      %s937 = scalar_lea.vmem [#allocation2], 48
      %v938 = vld [vmem:[%s937] sm:$0xff]
      %v939 = vld [vmem:[%s937 + $0x8] sm:$0xff]
      %v940 = vld [vmem:[%s937 + $0x18] sm:$0xff]
      %v941 = vld [vmem:[%s937 + $0x20] sm:$0xff]
      %v942 = vld [vmem:[%s937 + $0x30] sm:$0xff]
      %v943 = vld [vmem:[%s937 + $0x38] sm:$0xff]
      %v944 = vld [vmem:[%s937 + $0x48] sm:$0xff]
      %v945 = vld [vmem:[%s937 + $0x50] sm:$0xff]
      %v946 = vld [vmem:[%s937 + $0x60] sm:$0xff]
      %v947 = vld [vmem:[%s937 + $0x68] sm:$0xff]
      %v948 = vld [vmem:[%s937 + $0x78] sm:$0xff]
      %v949 = vld [vmem:[%s937 + $0x80] sm:$0xff]
      %v950 = vld [vmem:[%s937 + $0x90] sm:$0xff]
      %v951 = vld [vmem:[%s937 + $0x98] sm:$0xff]
      %v952 = vld [vmem:[%s937 + $0xa8] sm:$0xff]
      %v953 = vld [vmem:[%s937 + $0xb0] sm:$0xff]
      %v954 = vld [vmem:[%s937 + $0xc0] sm:$0xff]
      %v955 = vld [vmem:[%s937 + $0xc8] sm:$0xff]
      %v956 = vld [vmem:[%s937 + $0xd8] sm:$0xff]
      %v957 = vld [vmem:[%s937 + $0xe0] sm:$0xff]
      %v958 = vld [vmem:[%s937 + $0xf0] sm:$0xff]
      %v959 = vld [vmem:[%s937 + $0xf8] sm:$0xff]
      %v960 = vld [vmem:[%s937 + $0x108] sm:$0xff]
      %v961 = vld [vmem:[%s937 + $0x110] sm:$0xff]
      %v962 = vld [vmem:[%s937 + $0x120] sm:$0xff]
      %v963 = vld [vmem:[%s937 + $0x128] sm:$0xff]
      %v964 = vld [vmem:[%s937 + $0x138] sm:$0xff]
      %v965 = vld [vmem:[%s937 + $0x140] sm:$0xff]
      %v966 = vld [vmem:[%s937 + $0x150] sm:$0xff]
      %v967 = vld [vmem:[%s937 + $0x158] sm:$0xff]
      %v968 = vld [vmem:[%s937 + $0x168] sm:$0xff]
      %v969 = vld [vmem:[%s937 + $0x170] sm:$0xff]
      %v970 = vperm.slane %v936, 0
      %v971 = vmul.f32 %v970, %v938
      %v972 = vmul.f32 %v970, %v939
      %v973 = vmul.f32 %v970, %v940
      %v974 = vmul.f32 %v970, %v941
      %v975 = vmul.f32 %v970, %v942
      %v976 = vmul.f32 %v970, %v943
      %v977 = vmul.f32 %v970, %v944
      %v978 = vmul.f32 %v970, %v945
      %v979 = vmul.f32 %v970, %v946
      %v980 = vmul.f32 %v970, %v947
      %v981 = vmul.f32 %v970, %v948
      %v982 = vmul.f32 %v970, %v949
      %v983 = vmul.f32 %v970, %v950
      %v984 = vmul.f32 %v970, %v951
      %v985 = vmul.f32 %v970, %v952
      %v986 = vmul.f32 %v970, %v953
      %v987 = vmul.f32 %v970, %v954
      %v988 = vmul.f32 %v970, %v955
      %v989 = vmul.f32 %v970, %v956
      %v990 = vmul.f32 %v970, %v957
      %v991 = vmul.f32 %v970, %v958
      %v992 = vmul.f32 %v970, %v959
      %v993 = vmul.f32 %v970, %v960
      %v994 = vmul.f32 %v970, %v961
      %v995 = vmul.f32 %v970, %v962
      %v996 = vmul.f32 %v970, %v963
      %v997 = vmul.f32 %v970, %v964
      %v998 = vmul.f32 %v970, %v965
      %v999 = vmul.f32 %v970, %v966
      %v1000 = vmul.f32 %v970, %v967
      %v1001 = vmul.f32 %v970, %v968
      %v1002 = vmul.f32 %v970, %v969
      %v1003 = vadd.f32 %v904, %v971
      %v1004 = vadd.f32 %v905, %v972
      %v1005 = vadd.f32 %v906, %v973
      %v1006 = vadd.f32 %v907, %v974
      %v1007 = vadd.f32 %v908, %v975
      %v1008 = vadd.f32 %v909, %v976
      %v1009 = vadd.f32 %v910, %v977
      %v1010 = vadd.f32 %v911, %v978
      %v1011 = vadd.f32 %v912, %v979
      %v1012 = vadd.f32 %v913, %v980
      %v1013 = vadd.f32 %v914, %v981
      %v1014 = vadd.f32 %v915, %v982
      %v1015 = vadd.f32 %v916, %v983
      %v1016 = vadd.f32 %v917, %v984
      %v1017 = vadd.f32 %v918, %v985
      %v1018 = vadd.f32 %v919, %v986
      %v1019 = vadd.f32 %v920, %v987
      %v1020 = vadd.f32 %v921, %v988
      %v1021 = vadd.f32 %v922, %v989
      %v1022 = vadd.f32 %v923, %v990
      %v1023 = vadd.f32 %v924, %v991
      %v1024 = vadd.f32 %v925, %v992
      %v1025 = vadd.f32 %v926, %v993
      %v1026 = vadd.f32 %v927, %v994
      %v1027 = vadd.f32 %v928, %v995
      %v1028 = vadd.f32 %v929, %v996
      %v1029 = vadd.f32 %v930, %v997
      %v1030 = vadd.f32 %v931, %v998
      %v1031 = vadd.f32 %v932, %v999
      %v1032 = vadd.f32 %v933, %v1000
      %v1033 = vadd.f32 %v934, %v1001
      %v1034 = vadd.f32 %v935, %v1002
      %v1035 = vld [vmem:[%s213 + $0x7] sm:$0x1]
      %v1036 = vld [vmem:[%s937 + $0x1] sm:$0xff]
      %v1037 = vld [vmem:[%s937 + $0x9] sm:$0xff]
      %v1038 = vld [vmem:[%s937 + $0x19] sm:$0xff]
      %v1039 = vld [vmem:[%s937 + $0x21] sm:$0xff]
      %v1040 = vld [vmem:[%s937 + $0x31] sm:$0xff]
      %v1041 = vld [vmem:[%s937 + $0x39] sm:$0xff]
      %v1042 = vld [vmem:[%s937 + $0x49] sm:$0xff]
      %v1043 = vld [vmem:[%s937 + $0x51] sm:$0xff]
      %v1044 = vld [vmem:[%s937 + $0x61] sm:$0xff]
      %v1045 = vld [vmem:[%s937 + $0x69] sm:$0xff]
      %v1046 = vld [vmem:[%s937 + $0x79] sm:$0xff]
      %v1047 = vld [vmem:[%s937 + $0x81] sm:$0xff]
      %v1048 = vld [vmem:[%s937 + $0x91] sm:$0xff]
      %v1049 = vld [vmem:[%s937 + $0x99] sm:$0xff]
      %v1050 = vld [vmem:[%s937 + $0xa9] sm:$0xff]
      %v1051 = vld [vmem:[%s937 + $0xb1] sm:$0xff]
      %v1052 = vld [vmem:[%s937 + $0xc1] sm:$0xff]
      %v1053 = vld [vmem:[%s937 + $0xc9] sm:$0xff]
      %v1054 = vld [vmem:[%s937 + $0xd9] sm:$0xff]
      %v1055 = vld [vmem:[%s937 + $0xe1] sm:$0xff]
      %v1056 = vld [vmem:[%s937 + $0xf1] sm:$0xff]
      %v1057 = vld [vmem:[%s937 + $0xf9] sm:$0xff]
      %v1058 = vld [vmem:[%s937 + $0x109] sm:$0xff]
      %v1059 = vld [vmem:[%s937 + $0x111] sm:$0xff]
      %v1060 = vld [vmem:[%s937 + $0x121] sm:$0xff]
      %v1061 = vld [vmem:[%s937 + $0x129] sm:$0xff]
      %v1062 = vld [vmem:[%s937 + $0x139] sm:$0xff]
      %v1063 = vld [vmem:[%s937 + $0x141] sm:$0xff]
      %v1064 = vld [vmem:[%s937 + $0x151] sm:$0xff]
      %v1065 = vld [vmem:[%s937 + $0x159] sm:$0xff]
      %v1066 = vld [vmem:[%s937 + $0x169] sm:$0xff]
      %v1067 = vld [vmem:[%s937 + $0x171] sm:$0xff]
      %v1068 = vperm.slane %v1035, 0
      %v1069 = vmul.f32 %v1068, %v1036
      %v1070 = vmul.f32 %v1068, %v1037
      %v1071 = vmul.f32 %v1068, %v1038
      %v1072 = vmul.f32 %v1068, %v1039
      %v1073 = vmul.f32 %v1068, %v1040
      %v1074 = vmul.f32 %v1068, %v1041
      %v1075 = vmul.f32 %v1068, %v1042
      %v1076 = vmul.f32 %v1068, %v1043
      %v1077 = vmul.f32 %v1068, %v1044
      %v1078 = vmul.f32 %v1068, %v1045
      %v1079 = vmul.f32 %v1068, %v1046
      %v1080 = vmul.f32 %v1068, %v1047
      %v1081 = vmul.f32 %v1068, %v1048
      %v1082 = vmul.f32 %v1068, %v1049
      %v1083 = vmul.f32 %v1068, %v1050
      %v1084 = vmul.f32 %v1068, %v1051
      %v1085 = vmul.f32 %v1068, %v1052
      %v1086 = vmul.f32 %v1068, %v1053
      %v1087 = vmul.f32 %v1068, %v1054
      %v1088 = vmul.f32 %v1068, %v1055
      %v1089 = vmul.f32 %v1068, %v1056
      %v1090 = vmul.f32 %v1068, %v1057
      %v1091 = vmul.f32 %v1068, %v1058
      %v1092 = vmul.f32 %v1068, %v1059
      %v1093 = vmul.f32 %v1068, %v1060
      %v1094 = vmul.f32 %v1068, %v1061
      %v1095 = vmul.f32 %v1068, %v1062
      %v1096 = vmul.f32 %v1068, %v1063
      %v1097 = vmul.f32 %v1068, %v1064
      %v1098 = vmul.f32 %v1068, %v1065
      %v1099 = vmul.f32 %v1068, %v1066
      %v1100 = vmul.f32 %v1068, %v1067
      %v1101 = vadd.f32 %v1003, %v1069
      %v1102 = vadd.f32 %v1004, %v1070
      %v1103 = vadd.f32 %v1005, %v1071
      %v1104 = vadd.f32 %v1006, %v1072
      %v1105 = vadd.f32 %v1007, %v1073
      %v1106 = vadd.f32 %v1008, %v1074
      %v1107 = vadd.f32 %v1009, %v1075
      %v1108 = vadd.f32 %v1010, %v1076
      %v1109 = vadd.f32 %v1011, %v1077
      %v1110 = vadd.f32 %v1012, %v1078
      %v1111 = vadd.f32 %v1013, %v1079
      %v1112 = vadd.f32 %v1014, %v1080
      %v1113 = vadd.f32 %v1015, %v1081
      %v1114 = vadd.f32 %v1016, %v1082
      %v1115 = vadd.f32 %v1017, %v1083
      %v1116 = vadd.f32 %v1018, %v1084
      %v1117 = vadd.f32 %v1019, %v1085
      %v1118 = vadd.f32 %v1020, %v1086
      %v1119 = vadd.f32 %v1021, %v1087
      %v1120 = vadd.f32 %v1022, %v1088
      %v1121 = vadd.f32 %v1023, %v1089
      %v1122 = vadd.f32 %v1024, %v1090
      %v1123 = vadd.f32 %v1025, %v1091
      %v1124 = vadd.f32 %v1026, %v1092
      %v1125 = vadd.f32 %v1027, %v1093
      %v1126 = vadd.f32 %v1028, %v1094
      %v1127 = vadd.f32 %v1029, %v1095
      %v1128 = vadd.f32 %v1030, %v1096
      %v1129 = vadd.f32 %v1031, %v1097
      %v1130 = vadd.f32 %v1032, %v1098
      %v1131 = vadd.f32 %v1033, %v1099
      %v1132 = vadd.f32 %v1034, %v1100
      %v1133 = vld [vmem:[%s213 + $0x8] sm:$0x1]
      %v1134 = vld [vmem:[%s937 + $0x2] sm:$0xff]
      %v1135 = vld [vmem:[%s937 + $0xa] sm:$0xff]
      %v1136 = vld [vmem:[%s937 + $0x1a] sm:$0xff]
      %v1137 = vld [vmem:[%s937 + $0x22] sm:$0xff]
      %v1138 = vld [vmem:[%s937 + $0x32] sm:$0xff]
      %v1139 = vld [vmem:[%s937 + $0x3a] sm:$0xff]
      %v1140 = vld [vmem:[%s937 + $0x4a] sm:$0xff]
      %v1141 = vld [vmem:[%s937 + $0x52] sm:$0xff]
      %v1142 = vld [vmem:[%s937 + $0x62] sm:$0xff]
      %v1143 = vld [vmem:[%s937 + $0x6a] sm:$0xff]
      %v1144 = vld [vmem:[%s937 + $0x7a] sm:$0xff]
      %v1145 = vld [vmem:[%s937 + $0x82] sm:$0xff]
      %v1146 = vld [vmem:[%s937 + $0x92] sm:$0xff]
      %v1147 = vld [vmem:[%s937 + $0x9a] sm:$0xff]
      %v1148 = vld [vmem:[%s937 + $0xaa] sm:$0xff]
      %v1149 = vld [vmem:[%s937 + $0xb2] sm:$0xff]
      %v1150 = vld [vmem:[%s937 + $0xc2] sm:$0xff]
      %v1151 = vld [vmem:[%s937 + $0xca] sm:$0xff]
      %v1152 = vld [vmem:[%s937 + $0xda] sm:$0xff]
      %v1153 = vld [vmem:[%s937 + $0xe2] sm:$0xff]
      %v1154 = vld [vmem:[%s937 + $0xf2] sm:$0xff]
      %v1155 = vld [vmem:[%s937 + $0xfa] sm:$0xff]
      %v1156 = vld [vmem:[%s937 + $0x10a] sm:$0xff]
      %v1157 = vld [vmem:[%s937 + $0x112] sm:$0xff]
      %v1158 = vld [vmem:[%s937 + $0x122] sm:$0xff]
      %v1159 = vld [vmem:[%s937 + $0x12a] sm:$0xff]
      %v1160 = vld [vmem:[%s937 + $0x13a] sm:$0xff]
      %v1161 = vld [vmem:[%s937 + $0x142] sm:$0xff]
      %v1162 = vld [vmem:[%s937 + $0x152] sm:$0xff]
      %v1163 = vld [vmem:[%s937 + $0x15a] sm:$0xff]
      %v1164 = vld [vmem:[%s937 + $0x16a] sm:$0xff]
      %v1165 = vld [vmem:[%s937 + $0x172] sm:$0xff]
      %v1166 = vperm.slane %v1133, 0
      %v1167 = vmul.f32 %v1166, %v1134
      %v1168 = vmul.f32 %v1166, %v1135
      %v1169 = vmul.f32 %v1166, %v1136
      %v1170 = vmul.f32 %v1166, %v1137
      %v1171 = vmul.f32 %v1166, %v1138
      %v1172 = vmul.f32 %v1166, %v1139
      %v1173 = vmul.f32 %v1166, %v1140
      %v1174 = vmul.f32 %v1166, %v1141
      %v1175 = vmul.f32 %v1166, %v1142
      %v1176 = vmul.f32 %v1166, %v1143
      %v1177 = vmul.f32 %v1166, %v1144
      %v1178 = vmul.f32 %v1166, %v1145
      %v1179 = vmul.f32 %v1166, %v1146
      %v1180 = vmul.f32 %v1166, %v1147
      %v1181 = vmul.f32 %v1166, %v1148
      %v1182 = vmul.f32 %v1166, %v1149
      %v1183 = vmul.f32 %v1166, %v1150
      %v1184 = vmul.f32 %v1166, %v1151
      %v1185 = vmul.f32 %v1166, %v1152
      %v1186 = vmul.f32 %v1166, %v1153
      %v1187 = vmul.f32 %v1166, %v1154
      %v1188 = vmul.f32 %v1166, %v1155
      %v1189 = vmul.f32 %v1166, %v1156
      %v1190 = vmul.f32 %v1166, %v1157
      %v1191 = vmul.f32 %v1166, %v1158
      %v1192 = vmul.f32 %v1166, %v1159
      %v1193 = vmul.f32 %v1166, %v1160
      %v1194 = vmul.f32 %v1166, %v1161
      %v1195 = vmul.f32 %v1166, %v1162
      %v1196 = vmul.f32 %v1166, %v1163
      %v1197 = vmul.f32 %v1166, %v1164
      %v1198 = vmul.f32 %v1166, %v1165
      %v1199 = vadd.f32 %v1101, %v1167
      %v1200 = vadd.f32 %v1102, %v1168
      %v1201 = vadd.f32 %v1103, %v1169
      %v1202 = vadd.f32 %v1104, %v1170
      %v1203 = vadd.f32 %v1105, %v1171
      %v1204 = vadd.f32 %v1106, %v1172
      %v1205 = vadd.f32 %v1107, %v1173
      %v1206 = vadd.f32 %v1108, %v1174
      %v1207 = vadd.f32 %v1109, %v1175
      %v1208 = vadd.f32 %v1110, %v1176
      %v1209 = vadd.f32 %v1111, %v1177
      %v1210 = vadd.f32 %v1112, %v1178
      %v1211 = vadd.f32 %v1113, %v1179
      %v1212 = vadd.f32 %v1114, %v1180
      %v1213 = vadd.f32 %v1115, %v1181
      %v1214 = vadd.f32 %v1116, %v1182
      %v1215 = vadd.f32 %v1117, %v1183
      %v1216 = vadd.f32 %v1118, %v1184
      %v1217 = vadd.f32 %v1119, %v1185
      %v1218 = vadd.f32 %v1120, %v1186
      %v1219 = vadd.f32 %v1121, %v1187
      %v1220 = vadd.f32 %v1122, %v1188
      %v1221 = vadd.f32 %v1123, %v1189
      %v1222 = vadd.f32 %v1124, %v1190
      %v1223 = vadd.f32 %v1125, %v1191
      %v1224 = vadd.f32 %v1126, %v1192
      %v1225 = vadd.f32 %v1127, %v1193
      %v1226 = vadd.f32 %v1128, %v1194
      %v1227 = vadd.f32 %v1129, %v1195
      %v1228 = vadd.f32 %v1130, %v1196
      %v1229 = vadd.f32 %v1131, %v1197
      %v1230 = vadd.f32 %v1132, %v1198
      %v1231 = vmax.f32 %v1199, 0.0
      %v1232 = vmax.f32 %v1200, 0.0
      %v1233 = vmax.f32 %v1201, 0.0
      %v1234 = vmax.f32 %v1202, 0.0
      %v1235 = vmax.f32 %v1203, 0.0
      %v1236 = vmax.f32 %v1204, 0.0
      %v1237 = vmax.f32 %v1205, 0.0
      %v1238 = vmax.f32 %v1206, 0.0
      %v1239 = vmax.f32 %v1207, 0.0
      %v1240 = vmax.f32 %v1208, 0.0
      %v1241 = vmax.f32 %v1209, 0.0
      %v1242 = vmax.f32 %v1210, 0.0
      %v1243 = vmax.f32 %v1211, 0.0
      %v1244 = vmax.f32 %v1212, 0.0
      %v1245 = vmax.f32 %v1213, 0.0
      %v1246 = vmax.f32 %v1214, 0.0
      %v1247 = vmax.f32 %v1215, 0.0
      %v1248 = vmax.f32 %v1216, 0.0
      %v1249 = vmax.f32 %v1217, 0.0
      %v1250 = vmax.f32 %v1218, 0.0
      %v1251 = vmax.f32 %v1219, 0.0
      %v1252 = vmax.f32 %v1220, 0.0
      %v1253 = vmax.f32 %v1221, 0.0
      %v1254 = vmax.f32 %v1222, 0.0
      %v1255 = vmax.f32 %v1223, 0.0
      %v1256 = vmax.f32 %v1224, 0.0
      %v1257 = vmax.f32 %v1225, 0.0
      %v1258 = vmax.f32 %v1226, 0.0
      %v1259 = vmax.f32 %v1227, 0.0
      %v1260 = vmax.f32 %v1228, 0.0
      %v1261 = vmax.f32 %v1229, 0.0
      %v1262 = vmax.f32 %v1230, 0.0
      %1263 = vst.msk [vmem:[%s232] sm:$0xff] %vm233, %v1231
      %1264 = vst.msk [vmem:[%s232 + $0x8] sm:$0xff] %vm233, %v1232
      %1265 = vst.msk [vmem:[%s232 + $0x10] sm:$0xff] %vm233, %v1233
      %1266 = vst.msk [vmem:[%s232 + $0x18] sm:$0xff] %vm233, %v1234
      %1267 = vst.msk [vmem:[%s232 + $0x20] sm:$0xff] %vm233, %v1235
      %1268 = vst.msk [vmem:[%s232 + $0x28] sm:$0xff] %vm233, %v1236
      %1269 = vst.msk [vmem:[%s232 + $0x30] sm:$0xff] %vm233, %v1237
      %1270 = vst.msk [vmem:[%s232 + $0x38] sm:$0xff] %vm233, %v1238
      %1271 = vst.msk [vmem:[%s232 + $0x40] sm:$0xff] %vm233, %v1239
      %1272 = vst.msk [vmem:[%s232 + $0x48] sm:$0xff] %vm233, %v1240
      %1273 = vst.msk [vmem:[%s232 + $0x50] sm:$0xff] %vm233, %v1241
      %1274 = vst.msk [vmem:[%s232 + $0x58] sm:$0xff] %vm233, %v1242
      %1275 = vst.msk [vmem:[%s232 + $0x60] sm:$0xff] %vm233, %v1243
      %1276 = vst.msk [vmem:[%s232 + $0x68] sm:$0xff] %vm233, %v1244
      %1277 = vst.msk [vmem:[%s232 + $0x70] sm:$0xff] %vm233, %v1245
      %1278 = vst.msk [vmem:[%s232 + $0x78] sm:$0xff] %vm233, %v1246
      %1279 = vst.msk [vmem:[%s232 + $0x80] sm:$0xff] %vm233, %v1247
      %1280 = vst.msk [vmem:[%s232 + $0x88] sm:$0xff] %vm233, %v1248
      %1281 = vst.msk [vmem:[%s232 + $0x90] sm:$0xff] %vm233, %v1249
      %1282 = vst.msk [vmem:[%s232 + $0x98] sm:$0xff] %vm233, %v1250
      %1283 = vst.msk [vmem:[%s232 + $0xa0] sm:$0xff] %vm233, %v1251
      %1284 = vst.msk [vmem:[%s232 + $0xa8] sm:$0xff] %vm233, %v1252
      %1285 = vst.msk [vmem:[%s232 + $0xb0] sm:$0xff] %vm233, %v1253
      %1286 = vst.msk [vmem:[%s232 + $0xb8] sm:$0xff] %vm233, %v1254
      %1287 = vst.msk [vmem:[%s232 + $0xc0] sm:$0xff] %vm233, %v1255
      %1288 = vst.msk [vmem:[%s232 + $0xc8] sm:$0xff] %vm233, %v1256
      %1289 = vst.msk [vmem:[%s232 + $0xd0] sm:$0xff] %vm233, %v1257
      %1290 = vst.msk [vmem:[%s232 + $0xd8] sm:$0xff] %vm233, %v1258
      %1291 = vst.msk [vmem:[%s232 + $0xe0] sm:$0xff] %vm233, %v1259
      %1292 = vst.msk [vmem:[%s232 + $0xe8] sm:$0xff] %vm233, %v1260
      %1293 = vst.msk [vmem:[%s232 + $0xf0] sm:$0xff] %vm233, %v1261
      %1294 = vst.msk [vmem:[%s232 + $0xf8] sm:$0xff] %vm233, %v1262
      %p1295 = scmp.lt.s32.totalorder %s18, 1
      %s1296 = scalar_select %p1295, %s18, 1
      %p1297 = scmp.lt.s32.totalorder %s19, 0
      %s1298 = scalar_select %p1297, %s19, 0
      %s1299 = smul.addr %s1296, 32
      %s1300 = sadd.s32 %s1298, %s1299
      %s1301 = smul.addr %s1300, 8
      %s1302 = scalar_lea.vmem %s3, %s1301
      // Predicated region
      $region33: #{tpu_custom_call.1} parent=31 // pred_check
        %p1303 = pneg %p126
      $region34: #{tpu_custom_call.1} parent=31 // pred_check_branch
        %1305 = sbr.rel (%p1303) target = $region36
      $region35: #{tpu_custom_call.1} parent=31 // pred_region
        _
      $region36: #{tpu_custom_call.1} parent=31 // pred_fallthru
        _
    $region32: #{tpu_custom_call.1} parent=5 // pred_fallthru
      _
    %p1306 = scmp.le.s32.totalorder 2, %s9
    // Predicated region
    $region37: #{tpu_custom_call.1} parent=5 // pred_check
      %p1307 = pneg %p1306
    $region38: #{tpu_custom_call.1} parent=5 // pred_check_branch
      %1309 = sbr.rel (%p1307) target = $region40
    $region39: #{tpu_custom_call.1} parent=5 // pred_region
      %s1310 = ssub.s32 %s9, 2
      // Predicated region
      $region41: #{tpu_custom_call.1} parent=39 // pred_check
        %p1311 = pneg %p132
      $region42: #{tpu_custom_call.1} parent=39 // pred_check_branch
        %1313 = sbr.rel (%p1311) target = $region44
      $region43: #{tpu_custom_call.1} parent=39 // pred_region
        %p1314 = scmp.lt.s32.totalorder %s20, 1
        %s1315 = scalar_select %p1314, %s20, 1
        %p1316 = scmp.lt.s32.totalorder %s21, 0
        %s1317 = scalar_select %p1316, %s21, 0
        %s1318 = smul.addr %s1315, 32
        %s1319 = sadd.s32 %s1317, %s1318
        %s1320 = smul.addr %s1319, 8
        %s1321 = scalar_lea.vmem %s3, %s1320
      $region44: #{tpu_custom_call.1} parent=39 // pred_fallthru
        _
    $region40: #{tpu_custom_call.1} parent=5 // pred_fallthru
      _
  $region6: #{tpu_custom_call.1} parent=0 // loop_footer
    %s13 = sadd.s32 1, %s9
  $region7: #{tpu_custom_call.1} parent=0 // loop_footer_branch
    %8 = sbr.rel target = $region3
  $region8: #{tpu_custom_call.1} parent=0 // loop_exit
    _

</llo_original>
